<compile_context>
chip_gen: v6e
topology: v6e:2x2x1
jax: 0.10.0
libtpu: 0.0.40
codegen_flags: <defaults>
</compile_context>

<pallas_src>
import functools

import jax
import jax.numpy as jnp
from jax.experimental import pallas as pl
from jax.experimental.pallas import tpu as pltpu

_LANE = 128


def _round_up(x, m):
    return ((x + m - 1) // m) * m


# ---------------------------------------------------------------------------
# Pallas kernel: fused chain of Linear(+bias)(+ReLU) layers on a row tile.
#   refs = (x, w0, b0, w1, b1, ..., out)
#   x tile: (TM, K0) bf16;  w_i: (K_i, N_i) bf16;  b_i: (1, N_i) f32
# Matmuls run on the MXU in bf16 with f32 accumulation; epilogue math in f32.
# ---------------------------------------------------------------------------
def _mlp_kernel(*refs, relus):
    x_ref = refs[0]
    o_ref = refs[-1]
    wb = refs[1:-1]
    x = x_ref[...]
    for l, relu in enumerate(relus):
        w = wb[2 * l][...]
        b = wb[2 * l + 1][...]
        acc = jnp.dot(x.astype(jnp.bfloat16), w,
                      preferred_element_type=jnp.float32)
        acc = acc + b                      # (1, N) broadcasts over rows, f32
        if relu:
            acc = jnp.maximum(acc, 0.0)
        x = acc
    o_ref[...] = x.astype(o_ref.dtype)


def pallas_mlp(x, layers, relus, *, out_dtype=jnp.float32, tm=256):
    """x: (M, K0); layers: [(w, b), ...] with w (K,N) bf16, b (1,N) f32.

    Rows are tiled with a 'parallel' grid axis; all weights/biases are kept
    resident (block index (0,0) for every grid step).
    """
    M, K0 = x.shape
    n_out = layers[-1][0].shape[1]
    TM = min(tm, _round_up(max(M, 8), 8))
    grid = (pl.cdiv(M, TM),)

    in_specs = [pl.BlockSpec((TM, K0), lambda i: (i, 0))]
    args = [x]
    flops = 0
    bytes_accessed = (M * K0 * x.dtype.itemsize
                      + M * n_out * jnp.dtype(out_dtype).itemsize)
    for (w, b) in layers:
        K, N = w.shape
        in_specs.append(pl.BlockSpec((K, N), lambda i: (0, 0)))
        in_specs.append(pl.BlockSpec((1, N), lambda i: (0, 0)))
        args.append(w)
        args.append(b)
        flops += 2 * M * K * N
        bytes_accessed += w.size * w.dtype.itemsize + b.size * b.dtype.itemsize

    kern = functools.partial(_mlp_kernel, relus=tuple(relus))
    return pl.pallas_call(
        kern,
        out_shape=jax.ShapeDtypeStruct((M, n_out), out_dtype),
        grid=grid,
        in_specs=in_specs,
        out_specs=pl.BlockSpec((TM, n_out), lambda i: (i, 0)),
        compiler_params=pltpu.CompilerParams(
            dimension_semantics=("parallel",),
            vmem_limit_bytes=32 * 1024 * 1024),
        cost_estimate=pl.CostEstimate(flops=flops, transcendentals=0,
                                      bytes_accessed=bytes_accessed),
    )(*args)


# ---------------------------------------------------------------------------
# im2col on channels-last activations (pure data layout, plain JAX).
# Feature order is (kh, kw, C) -- weights are pre-reordered to match.
# ---------------------------------------------------------------------------
def im2col_nhwc(x, kh, kw, stride):
    B, H, W, C = x.shape
    oh = (H - kh) // stride + 1
    ow = (W - kw) // stride + 1
    cols = []
    for i in range(kh):
        for j in range(kw):
            cols.append(x[:, i:i + stride * oh:stride,
                          j:j + stride * ow:stride, :])
    p = jnp.concatenate(cols, axis=-1)               # (B, oh, ow, kh*kw*C)
    return p.reshape(B * oh * ow, kh * kw * C), oh, ow


# ---------------------------------------------------------------------------
# Parameters: raw (torch-layout) init + one-time TPU-friendly re-layout.
# ---------------------------------------------------------------------------
def init_params(key, n_actions, conv_flat):
    ks = jax.random.split(key, 10)
    s = 0.05
    return {
        "c1_w": jax.random.normal(ks[0], (32, 1, 8, 8), jnp.float32) * s,
        "c1_b": jax.random.normal(ks[1], (32,), jnp.float32) * s,
        "c2_w": jax.random.normal(ks[2], (64, 32, 4, 4), jnp.float32) * s,
        "c2_b": jax.random.normal(ks[3], (64,), jnp.float32) * s,
        "c3_w": jax.random.normal(ks[4], (64, 64, 3, 3), jnp.float32) * s,
        "c3_b": jax.random.normal(ks[5], (64,), jnp.float32) * s,
        "f1_w": jax.random.normal(ks[6], (512, conv_flat), jnp.float32) * s,
        "f1_b": jax.random.normal(ks[7], (512,), jnp.float32) * s,
        "f2_w": jax.random.normal(ks[8], (n_actions, 512), jnp.float32) * s,
        "f2_b": jax.random.normal(ks[9], (n_actions,), jnp.float32) * s,
    }


def prep_params(raw, n_actions):
    """One-time re-layout (run OUTSIDE the jitted forward).

    * conv weights -> (kh*kw*Cin, Cout) in (kh, kw, C) feature order, bf16
    * conv1/conv2 Cout and conv2/conv3 Cin padded to 128 lanes (zeros)
    * 1/255 input scale folded into conv1 weights
    * fc weights pre-transposed to (K, N); fc2 N padded to 128 lanes
    """
    def conv_w(w, *, cin_pad=None, cout_pad=None, scale=1.0):
        cout, cin, kh, kw = w.shape
        w = jnp.transpose(w, (2, 3, 1, 0))           # (kh, kw, cin, cout)
        if cin_pad is not None and cin_pad > cin:
            w = jnp.pad(w, ((0, 0), (0, 0), (0, cin_pad - cin), (0, 0)))
        if cout_pad is not None and cout_pad > cout:
            w = jnp.pad(w, ((0, 0), (0, 0), (0, 0), (0, cout_pad - cout)))
        w = w.reshape(kh * kw * w.shape[2], w.shape[3])
        return (w * scale).astype(jnp.bfloat16)

    def bias(b, n_pad=None):
        if n_pad is not None and n_pad > b.shape[0]:
            b = jnp.pad(b, (0, n_pad - b.shape[0]))
        return b.reshape(1, -1).astype(jnp.float32)

    n_pad = _round_up(n_actions, _LANE)
    return {
        "c1_w": conv_w(raw["c1_w"], cout_pad=_LANE, scale=1.0 / 255.0),
        "c1_b": bias(raw["c1_b"], _LANE),
        "c2_w": conv_w(raw["c2_w"], cin_pad=_LANE, cout_pad=_LANE),
        "c2_b": bias(raw["c2_b"], _LANE),
        "c3_w": conv_w(raw["c3_w"], cin_pad=_LANE),      # Cout=64 feeds fc1 K
        "c3_b": bias(raw["c3_b"]),
        "f1_w": raw["f1_w"].T.astype(jnp.bfloat16),      # (conv_flat, 512)
        "f1_b": bias(raw["f1_b"]),
        "f2_w": jnp.pad(raw["f2_w"].T,
                        ((0, 0), (0, n_pad - n_actions))).astype(jnp.bfloat16),
        "f2_b": bias(raw["f2_b"], n_pad),
    }


# ---------------------------------------------------------------------------
# Network forward (matches DoubleDQN/Network.py forward semantics).
# ---------------------------------------------------------------------------
def network_forward(params, state, *, n_actions):
    """state: (B, 1, H, W) float32 in [0, 255) -> (B, n_actions) float32."""
    B = state.shape[0]
    # NCHW -> channels-last once at entry; activations stay NHWC after that.
    x = jnp.transpose(state, (0, 2, 3, 1)).astype(jnp.bfloat16)

    # conv1 (state/255 folded into c1_w); output channels padded to 128 lanes
    p, oh, ow = im2col_nhwc(x, 8, 8, 4)
    x = pallas_mlp(p, [(params["c1_w"], params["c1_b"])], [True],
                   out_dtype=jnp.bfloat16)
    x = x.reshape(B, oh, ow, -1)

    # conv2
    p, oh, ow = im2col_nhwc(x, 4, 4, 2)
    x = pallas_mlp(p, [(params["c2_w"], params["c2_b"])], [True],
                   out_dtype=jnp.bfloat16)
    x = x.reshape(B, oh, ow, -1)

    # conv3 + flatten + fc1 + fc2
    p, oh, ow = im2col_nhwc(x, 3, 3, 1)
    if oh == 1 and ow == 1:
        # Fully fused head: conv3 + ReLU + fc1 + ReLU + fc2 in one pallas_call
        # (torch .view flatten order == channel order when spatial is 1x1).
        y = pallas_mlp(
            p,
            [(params["c3_w"], params["c3_b"]),
             (params["f1_w"], params["f1_b"]),
             (params["f2_w"], params["f2_b"])],
            [True, True, False],
            out_dtype=jnp.float32)
    else:
        # General spatial case: conv3, one NCHW-order flatten, fused fc1+fc2.
        x = pallas_mlp(p, [(params["c3_w"], params["c3_b"])], [True],
                       out_dtype=jnp.bfloat16)
        x = x.reshape(B, oh, ow, -1).transpose(0, 3, 1, 2).reshape(B, -1)
        y = pallas_mlp(
            x,
            [(params["f1_w"], params["f1_b"]),
             (params["f2_w"], params["f2_b"])],
            [True, False],
            out_dtype=jnp.float32)

    return y[:, :n_actions]


if __name__ == "__main__":
    # obs_shape = (36, 36, 1): conv spatial 8x8 -> 3x3 -> 1x1, conv_flat = 64
    H = W = 36
    n_actions = 6
    batch = 2
    conv_flat = 64 * 1 * 1

    root = jax.random.PRNGKey(0)
    k_params, k_state = jax.random.split(root)

    raw_params = init_params(k_params, n_actions, conv_flat)
    params = jax.block_until_ready(prep_params(raw_params, n_actions))

    state = jax.random.uniform(k_state, (batch, 1, H, W),
                               dtype=jnp.float32, minval=0.0, maxval=255.0)

    fwd = jax.jit(functools.partial(network_forward, n_actions=n_actions))
    out = jax.block_until_ready(fwd(params, state))

    assert out.shape == (batch, n_actions), out.shape
    assert out.dtype == jnp.float32
    assert bool(jnp.all(jnp.isfinite(out)))
    print("KERNEL_OK")
</pallas_src>

<mosaic_0001>
module attributes {stable_mosaic.version = 11 : i64} {
  func.func @_mlp_kernel(%arg0: i32, %arg1: memref<128x64xbf16, #tpu.memory_space<vmem>>, %arg2: memref<64x128xbf16, #tpu.memory_space<vmem>>, %arg3: memref<1x128xf32, #tpu.memory_space<vmem>>, %arg4: memref<128x128xbf16, #tpu.memory_space<vmem>>) attributes {dimension_semantics = [#tpu.dimension_semantics<parallel>], iteration_bounds = array<i64: 1>, scalar_prefetch = 0 : i64, scratch_operands = 0 : i64, tpu.core_type = #tpu.core_type<tc>, window_params = [{transform_indices = @transform_0, window_bounds = array<i64: 128, 64>}, {pipeline_mode = #tpu.pipeline_mode<synchronous>, transform_indices = @transform_1, window_bounds = array<i64: 64, 128>}, {pipeline_mode = #tpu.pipeline_mode<synchronous>, transform_indices = @transform_2, window_bounds = array<i64: 1, 128>}, {transform_indices = @transform_3, window_bounds = array<i64: 128, 128>}]} {
    %c0 = arith.constant 0 : index
    %c0_0 = arith.constant 0 : index
    %0 = vector.load %arg1[%c0, %c0_0] : memref<128x64xbf16, #tpu.memory_space<vmem>>, vector<128x64xbf16>
    %c0_1 = arith.constant 0 : index
    %c0_2 = arith.constant 0 : index
    %1 = vector.load %arg2[%c0_1, %c0_2] : memref<64x128xbf16, #tpu.memory_space<vmem>>, vector<64x128xbf16>
    %c0_3 = arith.constant 0 : index
    %c0_4 = arith.constant 0 : index
    %2 = vector.load %arg3[%c0_3, %c0_4] : memref<1x128xf32, #tpu.memory_space<vmem>>, vector<1x128xf32>
    %cst = arith.constant dense<0.000000e+00> : vector<128x128xf32>
    %3 = tpu.matmul %0, %1, %cst {dimension_numbers = #tpu.dot_dimension_numbers<[1], [0], [0], [1], [0, 0, 1, 1], [], []>} : vector<128x64xbf16>, vector<64x128xbf16>, vector<128x128xf32> -> vector<128x128xf32>
    %4 = vector.broadcast %2 : vector<1x128xf32> to vector<128x128xf32>
    %5 = arith.addf %3, %4 : vector<128x128xf32>
    %cst_5 = arith.constant 0.000000e+00 : f32
    %6 = vector.broadcast %cst_5 : f32 to vector<128x128xf32>
    %7 = arith.maximumf %5, %6 : vector<128x128xf32>
    %8 = arith.truncf %7 : vector<128x128xf32> to vector<128x128xbf16>
    %c0_6 = arith.constant 0 : index
    %c0_7 = arith.constant 0 : index
    %9 = vector.load %arg4[%c0_6, %c0_7] : memref<128x128xbf16, #tpu.memory_space<vmem>>, vector<128x128xbf16>
    tpu.vector_store %arg4[%c0_6, %c0_7], %8 {strides = array<i32>} : memref<128x128xbf16, #tpu.memory_space<vmem>>, vector<128x128xbf16>,
    return
  }
  func.func @transform_0(%arg0: i32) -> (i32, i32) {
    %c0_i32 = arith.constant 0 : i32
    %c0_i32_0 = arith.constant 0 : i32
    return %arg0, %c0_i32 : i32, i32
  }
  func.func @transform_1(%arg0: i32) -> (i32, i32) {
    %c0_i32 = arith.constant 0 : i32
    %c0_i32_0 = arith.constant 0 : i32
    %c0_i32_1 = arith.constant 0 : i32
    return %c0_i32, %c0_i32_0 : i32, i32
  }
  func.func @transform_2(%arg0: i32) -> (i32, i32) {
    %c0_i32 = arith.constant 0 : i32
    %c0_i32_0 = arith.constant 0 : i32
    %c0_i32_1 = arith.constant 0 : i32
    return %c0_i32, %c0_i32_0 : i32, i32
  }
  func.func @transform_3(%arg0: i32) -> (i32, i32) {
    %c0_i32 = arith.constant 0 : i32
    %c0_i32_0 = arith.constant 0 : i32
    return %arg0, %c0_i32 : i32, i32
  }
}

module attributes {stable_mosaic.version = 11 : i64} {
  func.func @_mlp_kernel(%arg0: i32, %arg1: memref<24x2048xbf16, #tpu.memory_space<vmem>>, %arg2: memref<2048x128xbf16, #tpu.memory_space<vmem>>, %arg3: memref<1x128xf32, #tpu.memory_space<vmem>>, %arg4: memref<24x128xbf16, #tpu.memory_space<vmem>>) attributes {dimension_semantics = [#tpu.dimension_semantics<parallel>], iteration_bounds = array<i64: 1>, scalar_prefetch = 0 : i64, scratch_operands = 0 : i64, tpu.core_type = #tpu.core_type<tc>, window_params = [{transform_indices = @transform_0, window_bounds = array<i64: 24, 2048>}, {pipeline_mode = #tpu.pipeline_mode<synchronous>, transform_indices = @transform_1, window_bounds = array<i64: 2048, 128>}, {pipeline_mode = #tpu.pipeline_mode<synchronous>, transform_indices = @transform_2, window_bounds = array<i64: 1, 128>}, {transform_indices = @transform_3, window_bounds = array<i64: 24, 128>}]} {
    %c0 = arith.constant 0 : index
    %c0_0 = arith.constant 0 : index
    %0 = vector.load %arg1[%c0, %c0_0] : memref<24x2048xbf16, #tpu.memory_space<vmem>>, vector<24x2048xbf16>
    %c0_1 = arith.constant 0 : index
    %c0_2 = arith.constant 0 : index
    %1 = vector.load %arg2[%c0_1, %c0_2] : memref<2048x128xbf16, #tpu.memory_space<vmem>>, vector<2048x128xbf16>
    %c0_3 = arith.constant 0 : index
    %c0_4 = arith.constant 0 : index
    %2 = vector.load %arg3[%c0_3, %c0_4] : memref<1x128xf32, #tpu.memory_space<vmem>>, vector<1x128xf32>
    %cst = arith.constant dense<0.000000e+00> : vector<24x128xf32>
    %3 = tpu.matmul %0, %1, %cst {dimension_numbers = #tpu.dot_dimension_numbers<[1], [0], [0], [1], [0, 0, 1, 1], [], []>} : vector<24x2048xbf16>, vector<2048x128xbf16>, vector<24x128xf32> -> vector<24x128xf32>
    %4 = vector.broadcast %2 : vector<1x128xf32> to vector<24x128xf32>
    %5 = arith.addf %3, %4 : vector<24x128xf32>
    %cst_5 = arith.constant 0.000000e+00 : f32
    %6 = vector.broadcast %cst_5 : f32 to vector<24x128xf32>
    %7 = arith.maximumf %5, %6 : vector<24x128xf32>
    %8 = arith.truncf %7 : vector<24x128xf32> to vector<24x128xbf16>
    %c0_6 = arith.constant 0 : index
    %c0_7 = arith.constant 0 : index
    %9 = vector.load %arg4[%c0_6, %c0_7] : memref<24x128xbf16, #tpu.memory_space<vmem>>, vector<24x128xbf16>
    tpu.vector_store %arg4[%c0_6, %c0_7], %8 {strides = array<i32>} : memref<24x128xbf16, #tpu.memory_space<vmem>>, vector<24x128xbf16>,
    return
  }
  func.func @transform_0(%arg0: i32) -> (i32, i32) {
    %c0_i32 = arith.constant 0 : i32
    %c0_i32_0 = arith.constant 0 : i32
    return %arg0, %c0_i32 : i32, i32
  }
  func.func @transform_1(%arg0: i32) -> (i32, i32) {
    %c0_i32 = arith.constant 0 : i32
    %c0_i32_0 = arith.constant 0 : i32
    %c0_i32_1 = arith.constant 0 : i32
    return %c0_i32, %c0_i32_0 : i32, i32
  }
  func.func @transform_2(%arg0: i32) -> (i32, i32) {
    %c0_i32 = arith.constant 0 : i32
    %c0_i32_0 = arith.constant 0 : i32
    %c0_i32_1 = arith.constant 0 : i32
    return %c0_i32, %c0_i32_0 : i32, i32
  }
  func.func @transform_3(%arg0: i32) -> (i32, i32) {
    %c0_i32 = arith.constant 0 : i32
    %c0_i32_0 = arith.constant 0 : i32
    return %arg0, %c0_i32 : i32, i32
  }
}

module attributes {stable_mosaic.version = 11 : i64} {
  func.func @_mlp_kernel(%arg0: i32, %arg1: memref<8x1152xbf16, #tpu.memory_space<vmem>>, %arg2: memref<1152x64xbf16, #tpu.memory_space<vmem>>, %arg3: memref<1x64xf32, #tpu.memory_space<vmem>>, %arg4: memref<64x512xbf16, #tpu.memory_space<vmem>>, %arg5: memref<1x512xf32, #tpu.memory_space<vmem>>, %arg6: memref<512x128xbf16, #tpu.memory_space<vmem>>, %arg7: memref<1x128xf32, #tpu.memory_space<vmem>>, %arg8: memref<8x128xf32, #tpu.memory_space<vmem>>) attributes {dimension_semantics = [#tpu.dimension_semantics<parallel>], iteration_bounds = array<i64: 1>, scalar_prefetch = 0 : i64, scratch_operands = 0 : i64, tpu.core_type = #tpu.core_type<tc>, window_params = [{transform_indices = @transform_0, window_bounds = array<i64: 8, 1152>}, {pipeline_mode = #tpu.pipeline_mode<synchronous>, transform_indices = @transform_1, window_bounds = array<i64: 1152, 64>}, {pipeline_mode = #tpu.pipeline_mode<synchronous>, transform_indices = @transform_2, window_bounds = array<i64: 1, 64>}, {pipeline_mode = #tpu.pipeline_mode<synchronous>, transform_indices = @transform_3, window_bounds = array<i64: 64, 512>}, {pipeline_mode = #tpu.pipeline_mode<synchronous>, transform_indices = @transform_4, window_bounds = array<i64: 1, 512>}, {pipeline_mode = #tpu.pipeline_mode<synchronous>, transform_indices = @transform_5, window_bounds = array<i64: 512, 128>}, {pipeline_mode = #tpu.pipeline_mode<synchronous>, transform_indices = @transform_6, window_bounds = array<i64: 1, 128>}, {transform_indices = @transform_7, window_bounds = array<i64: 8, 128>}]} {
    %c0 = arith.constant 0 : index
    %c0_0 = arith.constant 0 : index
    %0 = vector.load %arg1[%c0, %c0_0] : memref<8x1152xbf16, #tpu.memory_space<vmem>>, vector<8x1152xbf16>
    %c0_1 = arith.constant 0 : index
    %c0_2 = arith.constant 0 : index
    %1 = vector.load %arg2[%c0_1, %c0_2] : memref<1152x64xbf16, #tpu.memory_space<vmem>>, vector<1152x64xbf16>
    %c0_3 = arith.constant 0 : index
    %c0_4 = arith.constant 0 : index
    %2 = vector.load %arg3[%c0_3, %c0_4] : memref<1x64xf32, #tpu.memory_space<vmem>>, vector<1x64xf32>
    %cst = arith.constant dense<0.000000e+00> : vector<8x64xf32>
    %3 = tpu.matmul %0, %1, %cst {dimension_numbers = #tpu.dot_dimension_numbers<[1], [0], [0], [1], [0, 0, 1, 1], [], []>} : vector<8x1152xbf16>, vector<1152x64xbf16>, vector<8x64xf32> -> vector<8x64xf32>
    %4 = vector.broadcast %2 : vector<1x64xf32> to vector<8x64xf32>
    %5 = arith.addf %3, %4 : vector<8x64xf32>
    %cst_5 = arith.constant 0.000000e+00 : f32
    %6 = vector.broadcast %cst_5 : f32 to vector<8x64xf32>
    %7 = arith.maximumf %5, %6 : vector<8x64xf32>
    %c0_6 = arith.constant 0 : index
    %c0_7 = arith.constant 0 : index
    %8 = vector.load %arg4[%c0_6, %c0_7] : memref<64x512xbf16, #tpu.memory_space<vmem>>, vector<64x512xbf16>
    %c0_8 = arith.constant 0 : index
    %c0_9 = arith.constant 0 : index
    %9 = vector.load %arg5[%c0_8, %c0_9] : memref<1x512xf32, #tpu.memory_space<vmem>>, vector<1x512xf32>
    %10 = arith.truncf %7 : vector<8x64xf32> to vector<8x64xbf16>
    %cst_10 = arith.constant dense<0.000000e+00> : vector<8x512xf32>
    %11 = tpu.matmul %10, %8, %cst_10 {dimension_numbers = #tpu.dot_dimension_numbers<[1], [0], [0], [1], [0, 0, 1, 1], [], []>} : vector<8x64xbf16>, vector<64x512xbf16>, vector<8x512xf32> -> vector<8x512xf32>
    %12 = vector.broadcast %9 : vector<1x512xf32> to vector<8x512xf32>
    %13 = arith.addf %11, %12 : vector<8x512xf32>
    %cst_11 = arith.constant 0.000000e+00 : f32
    %14 = vector.broadcast %cst_11 : f32 to vector<8x512xf32>
    %15 = arith.maximumf %13, %14 : vector<8x512xf32>
    %c0_12 = arith.constant 0 : index
    %c0_13 = arith.constant 0 : index
    %16 = vector.load %arg6[%c0_12, %c0_13] : memref<512x128xbf16, #tpu.memory_space<vmem>>, vector<512x128xbf16>
    %c0_14 = arith.constant 0 : index
    %c0_15 = arith.constant 0 : index
    %17 = vector.load %arg7[%c0_14, %c0_15] : memref<1x128xf32, #tpu.memory_space<vmem>>, vector<1x128xf32>
    %18 = arith.truncf %15 : vector<8x512xf32> to vector<8x512xbf16>
    %cst_16 = arith.constant dense<0.000000e+00> : vector<8x128xf32>
    %19 = tpu.matmul %18, %16, %cst_16 {dimension_numbers = #tpu.dot_dimension_numbers<[1], [0], [0], [1], [0, 0, 1, 1], [], []>} : vector<8x512xbf16>, vector<512x128xbf16>, vector<8x128xf32> -> vector<8x128xf32>
    %20 = vector.broadcast %17 : vector<1x128xf32> to vector<8x128xf32>
    %21 = arith.addf %19, %20 : vector<8x128xf32>
    %c0_17 = arith.constant 0 : index
    %c0_18 = arith.constant 0 : index
    %22 = vector.load %arg8[%c0_17, %c0_18] : memref<8x128xf32, #tpu.memory_space<vmem>>, vector<8x128xf32>
    tpu.vector_store %arg8[%c0_17, %c0_18], %21 {strides = array<i32>} : memref<8x128xf32, #tpu.memory_space<vmem>>, vector<8x128xf32>,
    return
  }
  func.func @transform_0(%arg0: i32) -> (i32, i32) {
    %c0_i32 = arith.constant 0 : i32
    %c0_i32_0 = arith.constant 0 : i32
    return %arg0, %c0_i32 : i32, i32
  }
  func.func @transform_1(%arg0: i32) -> (i32, i32) {
    %c0_i32 = arith.constant 0 : i32
    %c0_i32_0 = arith.constant 0 : i32
    %c0_i32_1 = arith.constant 0 : i32
    return %c0_i32, %c0_i32_0 : i32, i32
  }
  func.func @transform_2(%arg0: i32) -> (i32, i32) {
    %c0_i32 = arith.constant 0 : i32
    %c0_i32_0 = arith.constant 0 : i32
    %c0_i32_1 = arith.constant 0 : i32
    return %c0_i32, %c0_i32_0 : i32, i32
  }
  func.func @transform_3(%arg0: i32) -> (i32, i32) {
    %c0_i32 = arith.constant 0 : i32
    %c0_i32_0 = arith.constant 0 : i32
    %c0_i32_1 = arith.constant 0 : i32
    return %c0_i32, %c0_i32_0 : i32, i32
  }
  func.func @transform_4(%arg0: i32) -> (i32, i32) {
    %c0_i32 = arith.constant 0 : i32
    %c0_i32_0 = arith.constant 0 : i32
    %c0_i32_1 = arith.constant 0 : i32
    return %c0_i32, %c0_i32_0 : i32, i32
  }
  func.func @transform_5(%arg0: i32) -> (i32, i32) {
    %c0_i32 = arith.constant 0 : i32
    %c0_i32_0 = arith.constant 0 : i32
    %c0_i32_1 = arith.constant 0 : i32
    return %c0_i32, %c0_i32_0 : i32, i32
  }
  func.func @transform_6(%arg0: i32) -> (i32, i32) {
    %c0_i32 = arith.constant 0 : i32
    %c0_i32_0 = arith.constant 0 : i32
    %c0_i32_1 = arith.constant 0 : i32
    return %c0_i32, %c0_i32_0 : i32, i32
  }
  func.func @transform_7(%arg0: i32) -> (i32, i32) {
    %c0_i32 = arith.constant 0 : i32
    %c0_i32_0 = arith.constant 0 : i32
    return %arg0, %c0_i32 : i32, i32
  }
}

</mosaic_0001>

<llo_original>
// kernel: network_forward.3
$region0: #{network_forward.3}
  #allocation0 [shape = 'u32[]', space=smem, size = 0x4, offset = 0x4, fixed_abs, tag = 'smem constant byte address 0x4 - core index']
  #allocation1 [shape = 'u32[144,128]{1,0:T(1,128)}', space=vmem, size = 0x12000, scoped, tag = 'internal scratch']
  %s0 = inlined_call_operand.vmem [shape: bf16[128,64], index: 0, kind: input, shape index: {}]
  %s1 = inlined_call_operand.vmem [shape: bf16[64,128], index: 1, kind: input, shape index: {}]
  %s2 = inlined_call_operand.vmem [shape: f32[1,128], index: 2, kind: input, shape index: {}]
  %s3 = inlined_call_operand.vmem [shape: bf16[128,128], index: 3, kind: output, shape index: {}]
  %s4 = sld [smem:[#allocation0]]
  $region22: #{network_forward.3} parent=0
    _
  %s6 = ssub.s32 1, %s4
  %s7 = scalar_select 0, %s6, %s4
  // Predicated region
  $region2: #{network_forward.3} parent=0 // pred_check
    _
  $region3: #{network_forward.3} parent=0 // pred_check_branch
    %9 = sbr.rel (0) target = $region5
  $region4: #{network_forward.3} parent=0 // pred_region
    _
  $region5: #{network_forward.3} parent=0 // pred_fallthru
    _
  // Predicated region
  $region6: #{network_forward.3} parent=0 // pred_check
    _
  $region7: #{network_forward.3} parent=0 // pred_check_branch
    %11 = sbr.rel (0) target = $region9
  $region8: #{network_forward.3} parent=0 // pred_region
    _
  $region9: #{network_forward.3} parent=0 // pred_fallthru
    _
  // Predicated region
  $region10: #{network_forward.3} parent=0 // pred_check
    _
  $region11: #{network_forward.3} parent=0 // pred_check_branch
    %13 = sbr.rel (0) target = $region13
  $region12: #{network_forward.3} parent=0 // pred_region
    _
  $region13: #{network_forward.3} parent=0 // pred_fallthru
    _
  %v15 = vld [vmem:[%s0] sm:$0xf]
  %v16 = vld [vmem:[%s0 + $0x4] sm:$0xf]
  %v17 = vld [vmem:[%s0 + $0x8] sm:$0xf]
  %v18 = vld [vmem:[%s0 + $0xc] sm:$0xf]
  %v19 = vld [vmem:[%s0 + $0x10] sm:$0xf]
  %v20 = vld [vmem:[%s0 + $0x14] sm:$0xf]
  %v21 = vld [vmem:[%s0 + $0x18] sm:$0xf]
  %v22 = vld [vmem:[%s0 + $0x1c] sm:$0xf]
  %v23 = vld [vmem:[%s0 + $0x20] sm:$0xf]
  %v24 = vld [vmem:[%s0 + $0x24] sm:$0xf]
  %v25 = vld [vmem:[%s0 + $0x28] sm:$0xf]
  %v26 = vld [vmem:[%s0 + $0x2c] sm:$0xf]
  %v27 = vld [vmem:[%s0 + $0x30] sm:$0xf]
  %v28 = vld [vmem:[%s0 + $0x34] sm:$0xf]
  %v29 = vld [vmem:[%s0 + $0x38] sm:$0xf]
  %v30 = vld [vmem:[%s0 + $0x3c] sm:$0xf]
  %v31 = vld [vmem:[%s1] sm:$0xf]
  %v32 = vld [vmem:[%s1 + $0x4] sm:$0xf]
  %v33 = vld [vmem:[%s1 + $0x8] sm:$0xf]
  %v34 = vld [vmem:[%s1 + $0xc] sm:$0xf]
  %v35 = vld [vmem:[%s1 + $0x10] sm:$0xf]
  %v36 = vld [vmem:[%s1 + $0x14] sm:$0xf]
  %v37 = vld [vmem:[%s1 + $0x18] sm:$0xf]
  %v38 = vld [vmem:[%s1 + $0x1c] sm:$0xf]
  %v39 = vld [vmem:[%s2] sm:$0x1]
  %v41 = vlaneseq
  %v42 = vshrl.u32 %v41, 7
  %v43 = vsub.s32 0, %v42
  %v44 = vrot.slane %v39, %v43
  %v62 = vunpack.c.l.b16 %v15
  %v63 = vunpack.c.l.b16 %v16
  %v64 = vunpack.c.l.b16 %v17
  %v65 = vunpack.c.l.b16 %v18
  %v66 = vunpack.c.l.b16 %v19
  %v67 = vunpack.c.l.b16 %v20
  %v68 = vunpack.c.l.b16 %v21
  %v69 = vunpack.c.l.b16 %v22
  %v70 = vunpack.c.l.b16 %v23
  %v71 = vunpack.c.l.b16 %v24
  %v72 = vunpack.c.l.b16 %v25
  %v73 = vunpack.c.l.b16 %v26
  %v74 = vunpack.c.l.b16 %v27
  %v75 = vunpack.c.l.b16 %v28
  %v76 = vunpack.c.l.b16 %v29
  %v77 = vunpack.c.l.b16 %v30
  %v78 = vpack.c.b16 %v63, %v62
  %v79 = vpack.c.b16 %v65, %v64
  %v80 = vpack.c.b16 %v67, %v66
  %v81 = vpack.c.b16 %v69, %v68
  %v82 = vpack.c.b16 %v71, %v70
  %v83 = vpack.c.b16 %v73, %v72
  %v84 = vpack.c.b16 %v75, %v74
  %v85 = vpack.c.b16 %v77, %v76
  %v94 = vunpack.c.l.b16 %v31
  %v95 = vunpack.c.l.b16 %v32
  %v96 = vunpack.c.l.b16 %v33
  %v97 = vunpack.c.l.b16 %v34
  %v98 = vunpack.c.l.b16 %v35
  %v99 = vunpack.c.l.b16 %v36
  %v100 = vunpack.c.l.b16 %v37
  %v101 = vunpack.c.l.b16 %v38
  %v102 = vpack.c.b16 %v95, %v94
  %v103 = vpack.c.b16 %v97, %v96
  %v104 = vpack.c.b16 %v99, %v98
  %v105 = vpack.c.b16 %v101, %v100
  %vm110 = vcmask 523264
  %v112 = vsel %vm110, %v78, 0
  %v115 = vsel %vm110, %v79, 0
  %v118 = vsel %vm110, %v80, 0
  %v121 = vsel %vm110, %v81, 0
  %v124 = vsel %vm110, %v82, 0
  %v127 = vsel %vm110, %v83, 0
  %v130 = vsel %vm110, %v84, 0
  %v133 = vsel %vm110, %v85, 0
  %135 = vmatprep.subr.bf16.mxu0 0
  %136 = vmatpush1.bf16.msra.mxu0 0
  %137 = vmatprep.subr.bf16.mxu0 0
  %138 = vmatpush1.bf16.msra.mxu0 0
  %139 = vmatprep.subr.bf16.mxu0 0
  %140 = vmatpush1.bf16.msra.mxu0 0
  %141 = vmatprep.subr.bf16.mxu0 0
  %142 = vmatpush1.bf16.msra.mxu0 0
  %143 = vmatprep.subr.bf16.mxu0 0
  %144 = vmatpush1.bf16.msra.mxu0 %v105
  %145 = vmatprep.subr.bf16.mxu0 0
  %146 = vmatpush1.bf16.msra.mxu0 %v104
  %147 = vmatprep.subr.bf16.mxu0 0
  %148 = vmatpush1.bf16.msra.mxu0 %v103
  %149 = vmatprep.subr.bf16.mxu0 0
  %150 = vmatpush1.bf16.msra.mxu0 %v102
  %151 = vmatprep.subr.bf16.mxu0 0
  %152 = vmatpush2.bf16.msra.mxu0 0
  %153 = vmatprep.subr.bf16.mxu0 0
  %154 = vmatpush2.bf16.msra.mxu0 0
  %155 = vmatprep.subr.bf16.mxu0 0
  %156 = vmatpush2.bf16.msra.mxu0 0
  %157 = vmatprep.subr.bf16.mxu0 0
  %158 = vmatpush2.bf16.msra.mxu0 0
  %159 = vmatprep.subr.bf16.mxu0 0
  %160 = vmatpush2.bf16.msra.mxu0 0
  %161 = vmatprep.subr.bf16.mxu0 0
  %162 = vmatpush2.bf16.msra.mxu0 0
  %163 = vmatprep.subr.bf16.mxu0 0
  %164 = vmatpush2.bf16.msra.mxu0 0
  %165 = vmatprep.subr.bf16.mxu0 0
  %166 = vmatpush2.bf16.msra.mxu0 0
  %167 = vmatprep.mubr.bf16.mxu0 0
  %168 = vmatmul.mubr.bf16.gmra.mxu0 %v112
  %v169 = vpop.f32.mrf.mxu0
  %v170 = vadd.f32 %v44, %v169
  %v171 = vpop.f32.mrf.mxu0
  %v172 = vpop.f32.mrf.mxu0
  %v173 = vadd.f32 %v44, %v172
  %v174 = vpop.f32.mrf.mxu0
  %175 = vmatprep.mubr.bf16.mxu0 0
  %176 = vmatmul.mubr.bf16.gmra.mxu0 %v115
  %v177 = vpop.f32.mrf.mxu0
  %v178 = vadd.f32 %v44, %v177
  %v179 = vpop.f32.mrf.mxu0
  %v180 = vpop.f32.mrf.mxu0
  %v181 = vadd.f32 %v44, %v180
  %v182 = vpop.f32.mrf.mxu0
  %183 = vmatprep.mubr.bf16.mxu0 0
  %184 = vmatmul.mubr.bf16.gmra.mxu0 %v118
  %v185 = vpop.f32.mrf.mxu0
  %v186 = vadd.f32 %v44, %v185
  %v187 = vpop.f32.mrf.mxu0
  %v188 = vpop.f32.mrf.mxu0
  %v189 = vadd.f32 %v44, %v188
  %v190 = vpop.f32.mrf.mxu0
  %191 = vmatprep.mubr.bf16.mxu0 0
  %192 = vmatmul.mubr.bf16.gmra.mxu0 %v121
  %v193 = vpop.f32.mrf.mxu0
  %v194 = vadd.f32 %v44, %v193
  %v195 = vpop.f32.mrf.mxu0
  %v196 = vpop.f32.mrf.mxu0
  %v197 = vadd.f32 %v44, %v196
  %v198 = vpop.f32.mrf.mxu0
  %199 = vmatprep.mubr.bf16.mxu0 0
  %200 = vmatmul.mubr.bf16.gmra.mxu0 %v124
  %v201 = vpop.f32.mrf.mxu0
  %v202 = vadd.f32 %v44, %v201
  %v203 = vpop.f32.mrf.mxu0
  %v204 = vpop.f32.mrf.mxu0
  %v205 = vadd.f32 %v44, %v204
  %v206 = vpop.f32.mrf.mxu0
  %207 = vmatprep.mubr.bf16.mxu0 0
  %208 = vmatmul.mubr.bf16.gmra.mxu0 %v127
  %v209 = vpop.f32.mrf.mxu0
  %v210 = vadd.f32 %v44, %v209
  %v211 = vpop.f32.mrf.mxu0
  %v212 = vpop.f32.mrf.mxu0
  %v213 = vadd.f32 %v44, %v212
  %v214 = vpop.f32.mrf.mxu0
  %215 = vmatprep.mubr.bf16.mxu0 0
  %216 = vmatmul.mubr.bf16.gmra.mxu0 %v130
  %v217 = vpop.f32.mrf.mxu0
  %v218 = vadd.f32 %v44, %v217
  %v219 = vpop.f32.mrf.mxu0
  %v220 = vpop.f32.mrf.mxu0
  %v221 = vadd.f32 %v44, %v220
  %v222 = vpop.f32.mrf.mxu0
  %223 = vmatprep.mubr.bf16.mxu0 0
  %224 = vmatmul.mubr.bf16.gmra.mxu0 %v133
  %v225 = vpop.f32.mrf.mxu0
  %v226 = vadd.f32 %v44, %v225
  %v227 = vpop.f32.mrf.mxu0
  %v228 = vpop.f32.mrf.mxu0
  %v229 = vadd.f32 %v44, %v228
  %v230 = vpop.f32.mrf.mxu0
  %231 = vdwg.mxu0
  %v232 = vmax.f32 %v170, 0.0
  %v233 = vmax.f32 %v173, 0.0
  %v234 = vmax.f32 %v178, 0.0
  %v235 = vmax.f32 %v181, 0.0
  %v236 = vmax.f32 %v186, 0.0
  %v237 = vmax.f32 %v189, 0.0
  %v238 = vmax.f32 %v194, 0.0
  %v239 = vmax.f32 %v197, 0.0
  %v240 = vmax.f32 %v202, 0.0
  %v241 = vmax.f32 %v205, 0.0
  %v242 = vmax.f32 %v210, 0.0
  %v243 = vmax.f32 %v213, 0.0
  %v244 = vmax.f32 %v218, 0.0
  %v245 = vmax.f32 %v221, 0.0
  %v246 = vmax.f32 %v226, 0.0
  %v247 = vmax.f32 %v229, 0.0
  %v248 = vpack.c.bf16 %v233, %v232
  %v249 = vpack.c.bf16 %v235, %v234
  %v250 = vpack.c.bf16 %v237, %v236
  %v251 = vpack.c.bf16 %v239, %v238
  %v252 = vpack.c.bf16 %v241, %v240
  %v253 = vpack.c.bf16 %v243, %v242
  %v254 = vpack.c.bf16 %v245, %v244
  %v255 = vpack.c.bf16 %v247, %v246
  %v264 = vunpack.c.l.b16 %v248
  %v265 = vunpack.c.h.b16 %v248
  %v266 = vunpack.c.l.b16 %v249
  %v267 = vunpack.c.h.b16 %v249
  %v268 = vunpack.c.l.b16 %v250
  %v269 = vunpack.c.h.b16 %v250
  %v270 = vunpack.c.l.b16 %v251
  %v271 = vunpack.c.h.b16 %v251
  %v272 = vunpack.c.l.b16 %v252
  %v273 = vunpack.c.h.b16 %v252
  %v274 = vunpack.c.l.b16 %v253
  %v275 = vunpack.c.h.b16 %v253
  %v276 = vunpack.c.l.b16 %v254
  %v277 = vunpack.c.h.b16 %v254
  %v278 = vunpack.c.l.b16 %v255
  %v279 = vunpack.c.h.b16 %v255
  %v280 = vpack.c.b16 %v264, %v264
  %v281 = vpack.c.b16 %v265, %v265
  %v282 = vpack.c.b16 %v266, %v266
  %v283 = vpack.c.b16 %v267, %v267
  %v284 = vpack.c.b16 %v268, %v268
  %v285 = vpack.c.b16 %v269, %v269
  %v286 = vpack.c.b16 %v270, %v270
  %v287 = vpack.c.b16 %v271, %v271
  %v288 = vpack.c.b16 %v272, %v272
  %v289 = vpack.c.b16 %v273, %v273
  %v290 = vpack.c.b16 %v274, %v274
  %v291 = vpack.c.b16 %v275, %v275
  %v292 = vpack.c.b16 %v276, %v276
  %v293 = vpack.c.b16 %v277, %v277
  %v294 = vpack.c.b16 %v278, %v278
  %v295 = vpack.c.b16 %v279, %v279
  %312 = vst [vmem:[%s3] sm:$0xf] %v280
  %313 = vst [vmem:[%s3 + $0x4] sm:$0xf] %v281
  %314 = vst [vmem:[%s3 + $0x8] sm:$0xf] %v282
  %315 = vst [vmem:[%s3 + $0xc] sm:$0xf] %v283
  %316 = vst [vmem:[%s3 + $0x10] sm:$0xf] %v284
  %317 = vst [vmem:[%s3 + $0x14] sm:$0xf] %v285
  %318 = vst [vmem:[%s3 + $0x18] sm:$0xf] %v286
  %319 = vst [vmem:[%s3 + $0x1c] sm:$0xf] %v287
  %320 = vst [vmem:[%s3 + $0x20] sm:$0xf] %v288
  %321 = vst [vmem:[%s3 + $0x24] sm:$0xf] %v289
  %322 = vst [vmem:[%s3 + $0x28] sm:$0xf] %v290
  %323 = vst [vmem:[%s3 + $0x2c] sm:$0xf] %v291
  %324 = vst [vmem:[%s3 + $0x30] sm:$0xf] %v292
  %325 = vst [vmem:[%s3 + $0x34] sm:$0xf] %v293
  %326 = vst [vmem:[%s3 + $0x38] sm:$0xf] %v294
  %327 = vst [vmem:[%s3 + $0x3c] sm:$0xf] %v295
  // Predicated region
  $region14: #{network_forward.3} parent=0 // pred_check
    _
  $region15: #{network_forward.3} parent=0 // pred_check_branch
    %329 = sbr.rel (0) target = $region17
  $region16: #{network_forward.3} parent=0 // pred_region
    _
  $region17: #{network_forward.3} parent=0 // pred_fallthru
    _
  // Predicated region
  $region18: #{network_forward.3} parent=0 // pred_check
    _
  $region19: #{network_forward.3} parent=0 // pred_check_branch
    %331 = sbr.rel (0) target = $region21
  $region20: #{network_forward.3} parent=0 // pred_region
    _
  $region21: #{network_forward.3} parent=0 // pred_fallthru
    _

// kernel: network_forward.4
$region0: #{network_forward.4}
  #allocation0 [shape = 'u32[]', space=smem, size = 0x4, offset = 0x4, fixed_abs, tag = 'smem constant byte address 0x4 - core index']
  #allocation1 [shape = 'u32[144,128]{1,0:T(1,128)}', space=vmem, size = 0x12000, scoped, tag = 'internal scratch']
  %s0 = inlined_call_operand.vmem [shape: bf16[18,2048], index: 0, kind: input, shape index: {}]
  %s1 = inlined_call_operand.vmem [shape: bf16[2048,128], index: 1, kind: input, shape index: {}]
  %s2 = inlined_call_operand.vmem [shape: f32[1,128], index: 2, kind: input, shape index: {}]
  %s3 = inlined_call_operand.vmem [shape: bf16[18,128], index: 3, kind: output, shape index: {}]
  %s4 = sld [smem:[#allocation0]]
  $region22: #{network_forward.4} parent=0
    _
  %s6 = ssub.s32 1, %s4
  %s7 = scalar_select 0, %s6, %s4
  // Predicated region
  $region2: #{network_forward.4} parent=0 // pred_check
    _
  $region3: #{network_forward.4} parent=0 // pred_check_branch
    %9 = sbr.rel (0) target = $region5
  $region4: #{network_forward.4} parent=0 // pred_region
    _
  $region5: #{network_forward.4} parent=0 // pred_fallthru
    _
  // Predicated region
  $region6: #{network_forward.4} parent=0 // pred_check
    _
  $region7: #{network_forward.4} parent=0 // pred_check_branch
    %11 = sbr.rel (0) target = $region9
  $region8: #{network_forward.4} parent=0 // pred_region
    _
  $region9: #{network_forward.4} parent=0 // pred_fallthru
    _
  // Predicated region
  $region10: #{network_forward.4} parent=0 // pred_check
    _
  $region11: #{network_forward.4} parent=0 // pred_check_branch
    %13 = sbr.rel (0) target = $region13
  $region12: #{network_forward.4} parent=0 // pred_region
    _
  $region13: #{network_forward.4} parent=0 // pred_fallthru
    _
  %v15 = vld [vmem:[%s0] sm:$0xff]
  %v16 = vld [vmem:[%s0 + $0x8] sm:$0xff]
  %v17 = vld [vmem:[%s0 + $0x10] sm:$0xff]
  %v18 = vld [vmem:[%s0 + $0x18] sm:$0xff]
  %v19 = vld [vmem:[%s0 + $0x20] sm:$0xff]
  %v20 = vld [vmem:[%s0 + $0x28] sm:$0xff]
  %v21 = vld [vmem:[%s0 + $0x30] sm:$0xff]
  %v22 = vld [vmem:[%s0 + $0x38] sm:$0xff]
  %v23 = vld [vmem:[%s0 + $0x40] sm:$0xff]
  %v24 = vld [vmem:[%s0 + $0x48] sm:$0xff]
  %v25 = vld [vmem:[%s0 + $0x50] sm:$0xff]
  %v26 = vld [vmem:[%s0 + $0x58] sm:$0xff]
  %v27 = vld [vmem:[%s0 + $0x60] sm:$0xff]
  %v28 = vld [vmem:[%s0 + $0x68] sm:$0xff]
  %v29 = vld [vmem:[%s0 + $0x70] sm:$0xff]
  %v30 = vld [vmem:[%s0 + $0x78] sm:$0xff]
  %v31 = vld [vmem:[%s0 + $0x80] sm:$0xff]
  %v32 = vld [vmem:[%s0 + $0x88] sm:$0xff]
  %v33 = vld [vmem:[%s0 + $0x90] sm:$0xff]
  %v34 = vld [vmem:[%s0 + $0x98] sm:$0xff]
  %v35 = vld [vmem:[%s0 + $0xa0] sm:$0xff]
  %v36 = vld [vmem:[%s0 + $0xa8] sm:$0xff]
  %v37 = vld [vmem:[%s0 + $0xb0] sm:$0xff]
  %v38 = vld [vmem:[%s0 + $0xb8] sm:$0xff]
  %v39 = vld [vmem:[%s1] sm:$0xf]
  %v40 = vld [vmem:[%s1 + $0x4] sm:$0xf]
  %v41 = vld [vmem:[%s1 + $0x8] sm:$0xf]
  %v42 = vld [vmem:[%s1 + $0xc] sm:$0xf]
  %v43 = vld [vmem:[%s1 + $0x10] sm:$0xf]
  %v44 = vld [vmem:[%s1 + $0x14] sm:$0xf]
  %v45 = vld [vmem:[%s1 + $0x18] sm:$0xf]
  %v46 = vld [vmem:[%s1 + $0x1c] sm:$0xf]
  %v47 = vld [vmem:[%s1 + $0x20] sm:$0xf]
  %v48 = vld [vmem:[%s1 + $0x24] sm:$0xf]
  %v49 = vld [vmem:[%s1 + $0x28] sm:$0xf]
  %v50 = vld [vmem:[%s1 + $0x2c] sm:$0xf]
  %v51 = vld [vmem:[%s1 + $0x30] sm:$0xf]
  %v52 = vld [vmem:[%s1 + $0x34] sm:$0xf]
  %v53 = vld [vmem:[%s1 + $0x38] sm:$0xf]
  %v54 = vld [vmem:[%s1 + $0x3c] sm:$0xf]
  %v55 = vld [vmem:[%s1 + $0x40] sm:$0xf]
  %v56 = vld [vmem:[%s1 + $0x44] sm:$0xf]
  %v57 = vld [vmem:[%s1 + $0x48] sm:$0xf]
  %v58 = vld [vmem:[%s1 + $0x4c] sm:$0xf]
  %v59 = vld [vmem:[%s1 + $0x50] sm:$0xf]
  %v60 = vld [vmem:[%s1 + $0x54] sm:$0xf]
  %v61 = vld [vmem:[%s1 + $0x58] sm:$0xf]
  %v62 = vld [vmem:[%s1 + $0x5c] sm:$0xf]
  %v63 = vld [vmem:[%s1 + $0x60] sm:$0xf]
  %v64 = vld [vmem:[%s1 + $0x64] sm:$0xf]
  %v65 = vld [vmem:[%s1 + $0x68] sm:$0xf]
  %v66 = vld [vmem:[%s1 + $0x6c] sm:$0xf]
  %v67 = vld [vmem:[%s1 + $0x70] sm:$0xf]
  %v68 = vld [vmem:[%s1 + $0x74] sm:$0xf]
  %v69 = vld [vmem:[%s1 + $0x78] sm:$0xf]
  %v70 = vld [vmem:[%s1 + $0x7c] sm:$0xf]
  %v71 = vld [vmem:[%s1 + $0x80] sm:$0xf]
  %v72 = vld [vmem:[%s1 + $0x84] sm:$0xf]
  %v73 = vld [vmem:[%s1 + $0x88] sm:$0xf]
  %v74 = vld [vmem:[%s1 + $0x8c] sm:$0xf]
  %v75 = vld [vmem:[%s1 + $0x90] sm:$0xf]
  %v76 = vld [vmem:[%s1 + $0x94] sm:$0xf]
  %v77 = vld [vmem:[%s1 + $0x98] sm:$0xf]
  %v78 = vld [vmem:[%s1 + $0x9c] sm:$0xf]
  %v79 = vld [vmem:[%s1 + $0xa0] sm:$0xf]
  %v80 = vld [vmem:[%s1 + $0xa4] sm:$0xf]
  %v81 = vld [vmem:[%s1 + $0xa8] sm:$0xf]
  %v82 = vld [vmem:[%s1 + $0xac] sm:$0xf]
  %v83 = vld [vmem:[%s1 + $0xb0] sm:$0xf]
  %v84 = vld [vmem:[%s1 + $0xb4] sm:$0xf]
  %v85 = vld [vmem:[%s1 + $0xb8] sm:$0xf]
  %v86 = vld [vmem:[%s1 + $0xbc] sm:$0xf]
  %v87 = vld [vmem:[%s1 + $0xc0] sm:$0xf]
  %v88 = vld [vmem:[%s1 + $0xc4] sm:$0xf]
  %v89 = vld [vmem:[%s1 + $0xc8] sm:$0xf]
  %v90 = vld [vmem:[%s1 + $0xcc] sm:$0xf]
  %v91 = vld [vmem:[%s1 + $0xd0] sm:$0xf]
  %v92 = vld [vmem:[%s1 + $0xd4] sm:$0xf]
  %v93 = vld [vmem:[%s1 + $0xd8] sm:$0xf]
  %v94 = vld [vmem:[%s1 + $0xdc] sm:$0xf]
  %v95 = vld [vmem:[%s1 + $0xe0] sm:$0xf]
  %v96 = vld [vmem:[%s1 + $0xe4] sm:$0xf]
  %v97 = vld [vmem:[%s1 + $0xe8] sm:$0xf]
  %v98 = vld [vmem:[%s1 + $0xec] sm:$0xf]
  %v99 = vld [vmem:[%s1 + $0xf0] sm:$0xf]
  %v100 = vld [vmem:[%s1 + $0xf4] sm:$0xf]
  %v101 = vld [vmem:[%s1 + $0xf8] sm:$0xf]
  %v102 = vld [vmem:[%s1 + $0xfc] sm:$0xf]
  %v103 = vld [vmem:[%s1 + $0x100] sm:$0xf]
  %v104 = vld [vmem:[%s1 + $0x104] sm:$0xf]
  %v105 = vld [vmem:[%s1 + $0x108] sm:$0xf]
  %v106 = vld [vmem:[%s1 + $0x10c] sm:$0xf]
  %v107 = vld [vmem:[%s1 + $0x110] sm:$0xf]
  %v108 = vld [vmem:[%s1 + $0x114] sm:$0xf]
  %v109 = vld [vmem:[%s1 + $0x118] sm:$0xf]
  %v110 = vld [vmem:[%s1 + $0x11c] sm:$0xf]
  %v111 = vld [vmem:[%s1 + $0x120] sm:$0xf]
  %v112 = vld [vmem:[%s1 + $0x124] sm:$0xf]
  %v113 = vld [vmem:[%s1 + $0x128] sm:$0xf]
  %v114 = vld [vmem:[%s1 + $0x12c] sm:$0xf]
  %v115 = vld [vmem:[%s1 + $0x130] sm:$0xf]
  %v116 = vld [vmem:[%s1 + $0x134] sm:$0xf]
  %v117 = vld [vmem:[%s1 + $0x138] sm:$0xf]
  %v118 = vld [vmem:[%s1 + $0x13c] sm:$0xf]
  %v119 = vld [vmem:[%s1 + $0x140] sm:$0xf]
  %v120 = vld [vmem:[%s1 + $0x144] sm:$0xf]
  %v121 = vld [vmem:[%s1 + $0x148] sm:$0xf]
  %v122 = vld [vmem:[%s1 + $0x14c] sm:$0xf]
  %v123 = vld [vmem:[%s1 + $0x150] sm:$0xf]
  %v124 = vld [vmem:[%s1 + $0x154] sm:$0xf]
  %v125 = vld [vmem:[%s1 + $0x158] sm:$0xf]
  %v126 = vld [vmem:[%s1 + $0x15c] sm:$0xf]
  %v127 = vld [vmem:[%s1 + $0x160] sm:$0xf]
  %v128 = vld [vmem:[%s1 + $0x164] sm:$0xf]
  %v129 = vld [vmem:[%s1 + $0x168] sm:$0xf]
  %v130 = vld [vmem:[%s1 + $0x16c] sm:$0xf]
  %v131 = vld [vmem:[%s1 + $0x170] sm:$0xf]
  %v132 = vld [vmem:[%s1 + $0x174] sm:$0xf]
  %v133 = vld [vmem:[%s1 + $0x178] sm:$0xf]
  %v134 = vld [vmem:[%s1 + $0x17c] sm:$0xf]
  %v135 = vld [vmem:[%s1 + $0x180] sm:$0xf]
  %v136 = vld [vmem:[%s1 + $0x184] sm:$0xf]
  %v137 = vld [vmem:[%s1 + $0x188] sm:$0xf]
  %v138 = vld [vmem:[%s1 + $0x18c] sm:$0xf]
  %v139 = vld [vmem:[%s1 + $0x190] sm:$0xf]
  %v140 = vld [vmem:[%s1 + $0x194] sm:$0xf]
  %v141 = vld [vmem:[%s1 + $0x198] sm:$0xf]
  %v142 = vld [vmem:[%s1 + $0x19c] sm:$0xf]
  %v143 = vld [vmem:[%s1 + $0x1a0] sm:$0xf]
  %v144 = vld [vmem:[%s1 + $0x1a4] sm:$0xf]
  %v145 = vld [vmem:[%s1 + $0x1a8] sm:$0xf]
  %v146 = vld [vmem:[%s1 + $0x1ac] sm:$0xf]
  %v147 = vld [vmem:[%s1 + $0x1b0] sm:$0xf]
  %v148 = vld [vmem:[%s1 + $0x1b4] sm:$0xf]
  %v149 = vld [vmem:[%s1 + $0x1b8] sm:$0xf]
  %v150 = vld [vmem:[%s1 + $0x1bc] sm:$0xf]
  %v151 = vld [vmem:[%s1 + $0x1c0] sm:$0xf]
  %v152 = vld [vmem:[%s1 + $0x1c4] sm:$0xf]
  %v153 = vld [vmem:[%s1 + $0x1c8] sm:$0xf]
  %v154 = vld [vmem:[%s1 + $0x1cc] sm:$0xf]
  %v155 = vld [vmem:[%s1 + $0x1d0] sm:$0xf]
  %v156 = vld [vmem:[%s1 + $0x1d4] sm:$0xf]
  %v157 = vld [vmem:[%s1 + $0x1d8] sm:$0xf]
  %v158 = vld [vmem:[%s1 + $0x1dc] sm:$0xf]
  %v159 = vld [vmem:[%s1 + $0x1e0] sm:$0xf]
  %v160 = vld [vmem:[%s1 + $0x1e4] sm:$0xf]
  %v161 = vld [vmem:[%s1 + $0x1e8] sm:$0xf]
  %v162 = vld [vmem:[%s1 + $0x1ec] sm:$0xf]
  %v163 = vld [vmem:[%s1 + $0x1f0] sm:$0xf]
  %v164 = vld [vmem:[%s1 + $0x1f4] sm:$0xf]
  %v165 = vld [vmem:[%s1 + $0x1f8] sm:$0xf]
  %v166 = vld [vmem:[%s1 + $0x1fc] sm:$0xf]
  %v167 = vld [vmem:[%s1 + $0x200] sm:$0xf]
  %v168 = vld [vmem:[%s1 + $0x204] sm:$0xf]
  %v169 = vld [vmem:[%s1 + $0x208] sm:$0xf]
  %v170 = vld [vmem:[%s1 + $0x20c] sm:$0xf]
  %v171 = vld [vmem:[%s1 + $0x210] sm:$0xf]
  %v172 = vld [vmem:[%s1 + $0x214] sm:$0xf]
  %v173 = vld [vmem:[%s1 + $0x218] sm:$0xf]
  %v174 = vld [vmem:[%s1 + $0x21c] sm:$0xf]
  %v175 = vld [vmem:[%s1 + $0x220] sm:$0xf]
  %v176 = vld [vmem:[%s1 + $0x224] sm:$0xf]
  %v177 = vld [vmem:[%s1 + $0x228] sm:$0xf]
  %v178 = vld [vmem:[%s1 + $0x22c] sm:$0xf]
  %v179 = vld [vmem:[%s1 + $0x230] sm:$0xf]
  %v180 = vld [vmem:[%s1 + $0x234] sm:$0xf]
  %v181 = vld [vmem:[%s1 + $0x238] sm:$0xf]
  %v182 = vld [vmem:[%s1 + $0x23c] sm:$0xf]
  %v183 = vld [vmem:[%s1 + $0x240] sm:$0xf]
  %v184 = vld [vmem:[%s1 + $0x244] sm:$0xf]
  %v185 = vld [vmem:[%s1 + $0x248] sm:$0xf]
  %v186 = vld [vmem:[%s1 + $0x24c] sm:$0xf]
  %v187 = vld [vmem:[%s1 + $0x250] sm:$0xf]
  %v188 = vld [vmem:[%s1 + $0x254] sm:$0xf]
  %v189 = vld [vmem:[%s1 + $0x258] sm:$0xf]
  %v190 = vld [vmem:[%s1 + $0x25c] sm:$0xf]
  %v191 = vld [vmem:[%s1 + $0x260] sm:$0xf]
  %v192 = vld [vmem:[%s1 + $0x264] sm:$0xf]
  %v193 = vld [vmem:[%s1 + $0x268] sm:$0xf]
  %v194 = vld [vmem:[%s1 + $0x26c] sm:$0xf]
  %v195 = vld [vmem:[%s1 + $0x270] sm:$0xf]
  %v196 = vld [vmem:[%s1 + $0x274] sm:$0xf]
  %v197 = vld [vmem:[%s1 + $0x278] sm:$0xf]
  %v198 = vld [vmem:[%s1 + $0x27c] sm:$0xf]
  %v199 = vld [vmem:[%s1 + $0x280] sm:$0xf]
  %v200 = vld [vmem:[%s1 + $0x284] sm:$0xf]
  %v201 = vld [vmem:[%s1 + $0x288] sm:$0xf]
  %v202 = vld [vmem:[%s1 + $0x28c] sm:$0xf]
  %v203 = vld [vmem:[%s1 + $0x290] sm:$0xf]
  %v204 = vld [vmem:[%s1 + $0x294] sm:$0xf]
  %v205 = vld [vmem:[%s1 + $0x298] sm:$0xf]
  %v206 = vld [vmem:[%s1 + $0x29c] sm:$0xf]
  %v207 = vld [vmem:[%s1 + $0x2a0] sm:$0xf]
  %v208 = vld [vmem:[%s1 + $0x2a4] sm:$0xf]
  %v209 = vld [vmem:[%s1 + $0x2a8] sm:$0xf]
  %v210 = vld [vmem:[%s1 + $0x2ac] sm:$0xf]
  %v211 = vld [vmem:[%s1 + $0x2b0] sm:$0xf]
  %v212 = vld [vmem:[%s1 + $0x2b4] sm:$0xf]
  %v213 = vld [vmem:[%s1 + $0x2b8] sm:$0xf]
  %v214 = vld [vmem:[%s1 + $0x2bc] sm:$0xf]
  %v215 = vld [vmem:[%s1 + $0x2c0] sm:$0xf]
  %v216 = vld [vmem:[%s1 + $0x2c4] sm:$0xf]
  %v217 = vld [vmem:[%s1 + $0x2c8] sm:$0xf]
  %v218 = vld [vmem:[%s1 + $0x2cc] sm:$0xf]
  %v219 = vld [vmem:[%s1 + $0x2d0] sm:$0xf]
  %v220 = vld [vmem:[%s1 + $0x2d4] sm:$0xf]
  %v221 = vld [vmem:[%s1 + $0x2d8] sm:$0xf]
  %v222 = vld [vmem:[%s1 + $0x2dc] sm:$0xf]
  %v223 = vld [vmem:[%s1 + $0x2e0] sm:$0xf]
  %v224 = vld [vmem:[%s1 + $0x2e4] sm:$0xf]
  %v225 = vld [vmem:[%s1 + $0x2e8] sm:$0xf]
  %v226 = vld [vmem:[%s1 + $0x2ec] sm:$0xf]
  %v227 = vld [vmem:[%s1 + $0x2f0] sm:$0xf]
  %v228 = vld [vmem:[%s1 + $0x2f4] sm:$0xf]
  %v229 = vld [vmem:[%s1 + $0x2f8] sm:$0xf]
  %v230 = vld [vmem:[%s1 + $0x2fc] sm:$0xf]
  %v231 = vld [vmem:[%s1 + $0x300] sm:$0xf]
  %v232 = vld [vmem:[%s1 + $0x304] sm:$0xf]
  %v233 = vld [vmem:[%s1 + $0x308] sm:$0xf]
  %v234 = vld [vmem:[%s1 + $0x30c] sm:$0xf]
  %v235 = vld [vmem:[%s1 + $0x310] sm:$0xf]
  %v236 = vld [vmem:[%s1 + $0x314] sm:$0xf]
  %v237 = vld [vmem:[%s1 + $0x318] sm:$0xf]
  %v238 = vld [vmem:[%s1 + $0x31c] sm:$0xf]
  %v239 = vld [vmem:[%s1 + $0x320] sm:$0xf]
  %v240 = vld [vmem:[%s1 + $0x324] sm:$0xf]
  %v241 = vld [vmem:[%s1 + $0x328] sm:$0xf]
  %v242 = vld [vmem:[%s1 + $0x32c] sm:$0xf]
  %v243 = vld [vmem:[%s1 + $0x330] sm:$0xf]
  %v244 = vld [vmem:[%s1 + $0x334] sm:$0xf]
  %v245 = vld [vmem:[%s1 + $0x338] sm:$0xf]
  %v246 = vld [vmem:[%s1 + $0x33c] sm:$0xf]
  %v247 = vld [vmem:[%s1 + $0x340] sm:$0xf]
  %v248 = vld [vmem:[%s1 + $0x344] sm:$0xf]
  %v249 = vld [vmem:[%s1 + $0x348] sm:$0xf]
  %v250 = vld [vmem:[%s1 + $0x34c] sm:$0xf]
  %v251 = vld [vmem:[%s1 + $0x350] sm:$0xf]
  %v252 = vld [vmem:[%s1 + $0x354] sm:$0xf]
  %v253 = vld [vmem:[%s1 + $0x358] sm:$0xf]
  %v254 = vld [vmem:[%s1 + $0x35c] sm:$0xf]
  %v255 = vld [vmem:[%s1 + $0x360] sm:$0xf]
  %v256 = vld [vmem:[%s1 + $0x364] sm:$0xf]
  %v257 = vld [vmem:[%s1 + $0x368] sm:$0xf]
  %v258 = vld [vmem:[%s1 + $0x36c] sm:$0xf]
  %v259 = vld [vmem:[%s1 + $0x370] sm:$0xf]
  %v260 = vld [vmem:[%s1 + $0x374] sm:$0xf]
  %v261 = vld [vmem:[%s1 + $0x378] sm:$0xf]
  %v262 = vld [vmem:[%s1 + $0x37c] sm:$0xf]
  %v263 = vld [vmem:[%s1 + $0x380] sm:$0xf]
  %v264 = vld [vmem:[%s1 + $0x384] sm:$0xf]
  %v265 = vld [vmem:[%s1 + $0x388] sm:$0xf]
  %v266 = vld [vmem:[%s1 + $0x38c] sm:$0xf]
  %v267 = vld [vmem:[%s1 + $0x390] sm:$0xf]
  %v268 = vld [vmem:[%s1 + $0x394] sm:$0xf]
  %v269 = vld [vmem:[%s1 + $0x398] sm:$0xf]
  %v270 = vld [vmem:[%s1 + $0x39c] sm:$0xf]
  %v271 = vld [vmem:[%s1 + $0x3a0] sm:$0xf]
  %v272 = vld [vmem:[%s1 + $0x3a4] sm:$0xf]
  %v273 = vld [vmem:[%s1 + $0x3a8] sm:$0xf]
  %v274 = vld [vmem:[%s1 + $0x3ac] sm:$0xf]
  %v275 = vld [vmem:[%s1 + $0x3b0] sm:$0xf]
  %v276 = vld [vmem:[%s1 + $0x3b4] sm:$0xf]
  %v277 = vld [vmem:[%s1 + $0x3b8] sm:$0xf]
  %v278 = vld [vmem:[%s1 + $0x3bc] sm:$0xf]
  %v279 = vld [vmem:[%s1 + $0x3c0] sm:$0xf]
  %v280 = vld [vmem:[%s1 + $0x3c4] sm:$0xf]
  %v281 = vld [vmem:[%s1 + $0x3c8] sm:$0xf]
  %v282 = vld [vmem:[%s1 + $0x3cc] sm:$0xf]
  %v283 = vld [vmem:[%s1 + $0x3d0] sm:$0xf]
  %v284 = vld [vmem:[%s1 + $0x3d4] sm:$0xf]
  %v285 = vld [vmem:[%s1 + $0x3d8] sm:$0xf]
  %v286 = vld [vmem:[%s1 + $0x3dc] sm:$0xf]
  %v287 = vld [vmem:[%s1 + $0x3e0] sm:$0xf]
  %v288 = vld [vmem:[%s1 + $0x3e4] sm:$0xf]
  %v289 = vld [vmem:[%s1 + $0x3e8] sm:$0xf]
  %v290 = vld [vmem:[%s1 + $0x3ec] sm:$0xf]
  %v291 = vld [vmem:[%s1 + $0x3f0] sm:$0xf]
  %v292 = vld [vmem:[%s1 + $0x3f4] sm:$0xf]
  %v293 = vld [vmem:[%s1 + $0x3f8] sm:$0xf]
  %v294 = vld [vmem:[%s1 + $0x3fc] sm:$0xf]
  %v295 = vld [vmem:[%s2] sm:$0x1]
  %v297 = vlaneseq
  %v298 = vshrl.u32 %v297, 7
  %v299 = vsub.s32 0, %v298
  %v300 = vrot.slane %v295, %v299
  %v326 = vunpack.c.l.b16 %v15
  %v327 = vunpack.c.h.b16 %v15
  %v328 = vunpack.c.l.b16 %v16
  %v329 = vunpack.c.h.b16 %v16
  %v330 = vunpack.c.l.b16 %v17
  %v331 = vunpack.c.h.b16 %v17
  %v332 = vunpack.c.l.b16 %v18
  %v333 = vunpack.c.h.b16 %v18
  %v334 = vunpack.c.l.b16 %v19
  %v335 = vunpack.c.h.b16 %v19
  %v336 = vunpack.c.l.b16 %v20
  %v337 = vunpack.c.h.b16 %v20
  %v338 = vunpack.c.l.b16 %v21
  %v339 = vunpack.c.h.b16 %v21
  %v340 = vunpack.c.l.b16 %v22
  %v341 = vunpack.c.h.b16 %v22
  %v342 = vunpack.c.l.b16 %v23
  %v343 = vunpack.c.h.b16 %v23
  %v344 = vunpack.c.l.b16 %v24
  %v345 = vunpack.c.h.b16 %v24
  %v346 = vunpack.c.l.b16 %v25
  %v347 = vunpack.c.h.b16 %v25
  %v348 = vunpack.c.l.b16 %v26
  %v349 = vunpack.c.h.b16 %v26
  %v350 = vunpack.c.l.b16 %v27
  %v351 = vunpack.c.h.b16 %v27
  %v352 = vunpack.c.l.b16 %v28
  %v353 = vunpack.c.h.b16 %v28
  %v354 = vunpack.c.l.b16 %v29
  %v355 = vunpack.c.h.b16 %v29
  %v356 = vunpack.c.l.b16 %v30
  %v357 = vunpack.c.h.b16 %v30
  %v358 = vunpack.c.l.b16 %v31
  %v359 = vunpack.c.h.b16 %v31
  %v360 = vunpack.c.l.b16 %v32
  %v361 = vunpack.c.h.b16 %v32
  %v362 = vunpack.c.l.b16 %v33
  %v363 = vunpack.c.h.b16 %v33
  %v364 = vunpack.c.l.b16 %v34
  %v365 = vunpack.c.h.b16 %v34
  %v366 = vunpack.c.l.b16 %v35
  %v367 = vunpack.c.h.b16 %v35
  %v368 = vunpack.c.l.b16 %v36
  %v369 = vunpack.c.h.b16 %v36
  %v370 = vunpack.c.l.b16 %v37
  %v371 = vunpack.c.h.b16 %v37
  %v372 = vunpack.c.l.b16 %v38
  %v373 = vunpack.c.h.b16 %v38
  %v374 = vpack.c.b16 %v342, %v326
  %v375 = vpack.c.b16 %v343, %v327
  %v376 = vpack.c.b16 %v344, %v328
  %v377 = vpack.c.b16 %v345, %v329
  %v378 = vpack.c.b16 %v346, %v330
  %v379 = vpack.c.b16 %v347, %v331
  %v380 = vpack.c.b16 %v348, %v332
  %v381 = vpack.c.b16 %v349, %v333
  %v382 = vpack.c.b16 %v350, %v334
  %v383 = vpack.c.b16 %v351, %v335
  %v384 = vpack.c.b16 %v352, %v336
  %v385 = vpack.c.b16 %v353, %v337
  %v386 = vpack.c.b16 %v354, %v338
  %v387 = vpack.c.b16 %v355, %v339
  %v388 = vpack.c.b16 %v356, %v340
  %v389 = vpack.c.b16 %v357, %v341
  %v390 = vpack.c.b16 %v358, %v358
  %v391 = vpack.c.b16 %v359, %v359
  %v392 = vpack.c.b16 %v360, %v360
  %v393 = vpack.c.b16 %v361, %v361
  %v394 = vpack.c.b16 %v362, %v362
  %v395 = vpack.c.b16 %v363, %v363
  %v396 = vpack.c.b16 %v364, %v364
  %v397 = vpack.c.b16 %v365, %v365
  %v398 = vpack.c.b16 %v366, %v366
  %v399 = vpack.c.b16 %v367, %v367
  %v400 = vpack.c.b16 %v368, %v368
  %v401 = vpack.c.b16 %v369, %v369
  %v402 = vpack.c.b16 %v370, %v370
  %v403 = vpack.c.b16 %v371, %v371
  %v404 = vpack.c.b16 %v372, %v372
  %v405 = vpack.c.b16 %v373, %v373
  %v694 = vunpack.c.l.b16 %v39
  %v695 = vunpack.c.l.b16 %v40
  %v696 = vunpack.c.l.b16 %v41
  %v697 = vunpack.c.l.b16 %v42
  %v698 = vunpack.c.l.b16 %v43
  %v699 = vunpack.c.l.b16 %v44
  %v700 = vunpack.c.l.b16 %v45
  %v701 = vunpack.c.l.b16 %v46
  %v702 = vunpack.c.l.b16 %v47
  %v703 = vunpack.c.l.b16 %v48
  %v704 = vunpack.c.l.b16 %v49
  %v705 = vunpack.c.l.b16 %v50
  %v706 = vunpack.c.l.b16 %v51
  %v707 = vunpack.c.l.b16 %v52
  %v708 = vunpack.c.l.b16 %v53
  %v709 = vunpack.c.l.b16 %v54
  %v710 = vunpack.c.l.b16 %v55
  %v711 = vunpack.c.l.b16 %v56
  %v712 = vunpack.c.l.b16 %v57
  %v713 = vunpack.c.l.b16 %v58
  %v714 = vunpack.c.l.b16 %v59
  %v715 = vunpack.c.l.b16 %v60
  %v716 = vunpack.c.l.b16 %v61
  %v717 = vunpack.c.l.b16 %v62
  %v718 = vunpack.c.l.b16 %v63
  %v719 = vunpack.c.l.b16 %v64
  %v720 = vunpack.c.l.b16 %v65
  %v721 = vunpack.c.l.b16 %v66
  %v722 = vunpack.c.l.b16 %v67
  %v723 = vunpack.c.l.b16 %v68
  %v724 = vunpack.c.l.b16 %v69
  %v725 = vunpack.c.l.b16 %v70
  %v726 = vunpack.c.l.b16 %v71
  %v727 = vunpack.c.l.b16 %v72
  %v728 = vunpack.c.l.b16 %v73
  %v729 = vunpack.c.l.b16 %v74
  %v730 = vunpack.c.l.b16 %v75
  %v731 = vunpack.c.l.b16 %v76
  %v732 = vunpack.c.l.b16 %v77
  %v733 = vunpack.c.l.b16 %v78
  %v734 = vunpack.c.l.b16 %v79
  %v735 = vunpack.c.l.b16 %v80
  %v736 = vunpack.c.l.b16 %v81
  %v737 = vunpack.c.l.b16 %v82
  %v738 = vunpack.c.l.b16 %v83
  %v739 = vunpack.c.l.b16 %v84
  %v740 = vunpack.c.l.b16 %v85
  %v741 = vunpack.c.l.b16 %v86
  %v742 = vunpack.c.l.b16 %v87
  %v743 = vunpack.c.l.b16 %v88
  %v744 = vunpack.c.l.b16 %v89
  %v745 = vunpack.c.l.b16 %v90
  %v746 = vunpack.c.l.b16 %v91
  %v747 = vunpack.c.l.b16 %v92
  %v748 = vunpack.c.l.b16 %v93
  %v749 = vunpack.c.l.b16 %v94
  %v750 = vunpack.c.l.b16 %v95
  %v751 = vunpack.c.l.b16 %v96
  %v752 = vunpack.c.l.b16 %v97
  %v753 = vunpack.c.l.b16 %v98
  %v754 = vunpack.c.l.b16 %v99
  %v755 = vunpack.c.l.b16 %v100
  %v756 = vunpack.c.l.b16 %v101
  %v757 = vunpack.c.l.b16 %v102
  %v758 = vunpack.c.l.b16 %v103
  %v759 = vunpack.c.l.b16 %v104
  %v760 = vunpack.c.l.b16 %v105
  %v761 = vunpack.c.l.b16 %v106
  %v762 = vunpack.c.l.b16 %v107
  %v763 = vunpack.c.l.b16 %v108
  %v764 = vunpack.c.l.b16 %v109
  %v765 = vunpack.c.l.b16 %v110
  %v766 = vunpack.c.l.b16 %v111
  %v767 = vunpack.c.l.b16 %v112
  %v768 = vunpack.c.l.b16 %v113
  %v769 = vunpack.c.l.b16 %v114
  %v770 = vunpack.c.l.b16 %v115
  %v771 = vunpack.c.l.b16 %v116
  %v772 = vunpack.c.l.b16 %v117
  %v773 = vunpack.c.l.b16 %v118
  %v774 = vunpack.c.l.b16 %v119
  %v775 = vunpack.c.l.b16 %v120
  %v776 = vunpack.c.l.b16 %v121
  %v777 = vunpack.c.l.b16 %v122
  %v778 = vunpack.c.l.b16 %v123
  %v779 = vunpack.c.l.b16 %v124
  %v780 = vunpack.c.l.b16 %v125
  %v781 = vunpack.c.l.b16 %v126
  %v782 = vunpack.c.l.b16 %v127
  %v783 = vunpack.c.l.b16 %v128
  %v784 = vunpack.c.l.b16 %v129
  %v785 = vunpack.c.l.b16 %v130
  %v786 = vunpack.c.l.b16 %v131
  %v787 = vunpack.c.l.b16 %v132
  %v788 = vunpack.c.l.b16 %v133
  %v789 = vunpack.c.l.b16 %v134
  %v790 = vunpack.c.l.b16 %v135
  %v791 = vunpack.c.l.b16 %v136
  %v792 = vunpack.c.l.b16 %v137
  %v793 = vunpack.c.l.b16 %v138
  %v794 = vunpack.c.l.b16 %v139
  %v795 = vunpack.c.l.b16 %v140
  %v796 = vunpack.c.l.b16 %v141
  %v797 = vunpack.c.l.b16 %v142
  %v798 = vunpack.c.l.b16 %v143
  %v799 = vunpack.c.l.b16 %v144
  %v800 = vunpack.c.l.b16 %v145
  %v801 = vunpack.c.l.b16 %v146
  %v802 = vunpack.c.l.b16 %v147
  %v803 = vunpack.c.l.b16 %v148
  %v804 = vunpack.c.l.b16 %v149
  %v805 = vunpack.c.l.b16 %v150
  %v806 = vunpack.c.l.b16 %v151
  %v807 = vunpack.c.l.b16 %v152
  %v808 = vunpack.c.l.b16 %v153
  %v809 = vunpack.c.l.b16 %v154
  %v810 = vunpack.c.l.b16 %v155
  %v811 = vunpack.c.l.b16 %v156
  %v812 = vunpack.c.l.b16 %v157
  %v813 = vunpack.c.l.b16 %v158
  %v814 = vunpack.c.l.b16 %v159
  %v815 = vunpack.c.l.b16 %v160
  %v816 = vunpack.c.l.b16 %v161
  %v817 = vunpack.c.l.b16 %v162
  %v818 = vunpack.c.l.b16 %v163
  %v819 = vunpack.c.l.b16 %v164
  %v820 = vunpack.c.l.b16 %v165
  %v821 = vunpack.c.l.b16 %v166
  %v822 = vunpack.c.l.b16 %v167
  %v823 = vunpack.c.l.b16 %v168
  %v824 = vunpack.c.l.b16 %v169
  %v825 = vunpack.c.l.b16 %v170
  %v826 = vunpack.c.l.b16 %v171
  %v827 = vunpack.c.l.b16 %v172
  %v828 = vunpack.c.l.b16 %v173
  %v829 = vunpack.c.l.b16 %v174
  %v830 = vunpack.c.l.b16 %v175
  %v831 = vunpack.c.l.b16 %v176
  %v832 = vunpack.c.l.b16 %v177
  %v833 = vunpack.c.l.b16 %v178
  %v834 = vunpack.c.l.b16 %v179
  %v835 = vunpack.c.l.b16 %v180
  %v836 = vunpack.c.l.b16 %v181
  %v837 = vunpack.c.l.b16 %v182
  %v838 = vunpack.c.l.b16 %v183
  %v839 = vunpack.c.l.b16 %v184
  %v840 = vunpack.c.l.b16 %v185
  %v841 = vunpack.c.l.b16 %v186
  %v842 = vunpack.c.l.b16 %v187
  %v843 = vunpack.c.l.b16 %v188
  %v844 = vunpack.c.l.b16 %v189
  %v845 = vunpack.c.l.b16 %v190
  %v846 = vunpack.c.l.b16 %v191
  %v847 = vunpack.c.l.b16 %v192
  %v848 = vunpack.c.l.b16 %v193
  %v849 = vunpack.c.l.b16 %v194
  %v850 = vunpack.c.l.b16 %v195
  %v851 = vunpack.c.l.b16 %v196
  %v852 = vunpack.c.l.b16 %v197
  %v853 = vunpack.c.l.b16 %v198
  %v854 = vunpack.c.l.b16 %v199
  %v855 = vunpack.c.l.b16 %v200
  %v856 = vunpack.c.l.b16 %v201
  %v857 = vunpack.c.l.b16 %v202
  %v858 = vunpack.c.l.b16 %v203
  %v859 = vunpack.c.l.b16 %v204
  %v860 = vunpack.c.l.b16 %v205
  %v861 = vunpack.c.l.b16 %v206
  %v862 = vunpack.c.l.b16 %v207
  %v863 = vunpack.c.l.b16 %v208
  %v864 = vunpack.c.l.b16 %v209
  %v865 = vunpack.c.l.b16 %v210
  %v866 = vunpack.c.l.b16 %v211
  %v867 = vunpack.c.l.b16 %v212
  %v868 = vunpack.c.l.b16 %v213
  %v869 = vunpack.c.l.b16 %v214
  %v870 = vunpack.c.l.b16 %v215
  %v871 = vunpack.c.l.b16 %v216
  %v872 = vunpack.c.l.b16 %v217
  %v873 = vunpack.c.l.b16 %v218
  %v874 = vunpack.c.l.b16 %v219
  %v875 = vunpack.c.l.b16 %v220
  %v876 = vunpack.c.l.b16 %v221
  %v877 = vunpack.c.l.b16 %v222
  %v878 = vunpack.c.l.b16 %v223
  %v879 = vunpack.c.l.b16 %v224
  %v880 = vunpack.c.l.b16 %v225
  %v881 = vunpack.c.l.b16 %v226
  %v882 = vunpack.c.l.b16 %v227
  %v883 = vunpack.c.l.b16 %v228
  %v884 = vunpack.c.l.b16 %v229
  %v885 = vunpack.c.l.b16 %v230
  %v886 = vunpack.c.l.b16 %v231
  %v887 = vunpack.c.l.b16 %v232
  %v888 = vunpack.c.l.b16 %v233
  %v889 = vunpack.c.l.b16 %v234
  %v890 = vunpack.c.l.b16 %v235
  %v891 = vunpack.c.l.b16 %v236
  %v892 = vunpack.c.l.b16 %v237
  %v893 = vunpack.c.l.b16 %v238
  %v894 = vunpack.c.l.b16 %v239
  %v895 = vunpack.c.l.b16 %v240
  %v896 = vunpack.c.l.b16 %v241
  %v897 = vunpack.c.l.b16 %v242
  %v898 = vunpack.c.l.b16 %v243
  %v899 = vunpack.c.l.b16 %v244
  %v900 = vunpack.c.l.b16 %v245
  %v901 = vunpack.c.l.b16 %v246
  %v902 = vunpack.c.l.b16 %v247
  %v903 = vunpack.c.l.b16 %v248
  %v904 = vunpack.c.l.b16 %v249
  %v905 = vunpack.c.l.b16 %v250
  %v906 = vunpack.c.l.b16 %v251
  %v907 = vunpack.c.l.b16 %v252
  %v908 = vunpack.c.l.b16 %v253
  %v909 = vunpack.c.l.b16 %v254
  %v910 = vunpack.c.l.b16 %v255
  %v911 = vunpack.c.l.b16 %v256
  %v912 = vunpack.c.l.b16 %v257
  %v913 = vunpack.c.l.b16 %v258
  %v914 = vunpack.c.l.b16 %v259
  %v915 = vunpack.c.l.b16 %v260
  %v916 = vunpack.c.l.b16 %v261
  %v917 = vunpack.c.l.b16 %v262
  %v918 = vunpack.c.l.b16 %v263
  %v919 = vunpack.c.l.b16 %v264
  %v920 = vunpack.c.l.b16 %v265
  %v921 = vunpack.c.l.b16 %v266
  %v922 = vunpack.c.l.b16 %v267
  %v923 = vunpack.c.l.b16 %v268
  %v924 = vunpack.c.l.b16 %v269
  %v925 = vunpack.c.l.b16 %v270
  %v926 = vunpack.c.l.b16 %v271
  %v927 = vunpack.c.l.b16 %v272
  %v928 = vunpack.c.l.b16 %v273
  %v929 = vunpack.c.l.b16 %v274
  %v930 = vunpack.c.l.b16 %v275
  %v931 = vunpack.c.l.b16 %v276
  %v932 = vunpack.c.l.b16 %v277
  %v933 = vunpack.c.l.b16 %v278
  %v934 = vunpack.c.l.b16 %v279
  %v935 = vunpack.c.l.b16 %v280
  %v936 = vunpack.c.l.b16 %v281
  %v937 = vunpack.c.l.b16 %v282
  %v938 = vunpack.c.l.b16 %v283
  %v939 = vunpack.c.l.b16 %v284
  %v940 = vunpack.c.l.b16 %v285
  %v941 = vunpack.c.l.b16 %v286
  %v942 = vunpack.c.l.b16 %v287
  %v943 = vunpack.c.l.b16 %v288
  %v944 = vunpack.c.l.b16 %v289
  %v945 = vunpack.c.l.b16 %v290
  %v946 = vunpack.c.l.b16 %v291
  %v947 = vunpack.c.l.b16 %v292
  %v948 = vunpack.c.l.b16 %v293
  %v949 = vunpack.c.l.b16 %v294
  %v950 = vpack.c.b16 %v695, %v694
  %v951 = vpack.c.b16 %v697, %v696
  %v952 = vpack.c.b16 %v699, %v698
  %v953 = vpack.c.b16 %v701, %v700
  %v954 = vpack.c.b16 %v703, %v702
  %v955 = vpack.c.b16 %v705, %v704
  %v956 = vpack.c.b16 %v707, %v706
  %v957 = vpack.c.b16 %v709, %v708
  %v958 = vpack.c.b16 %v711, %v710
  %v959 = vpack.c.b16 %v713, %v712
  %v960 = vpack.c.b16 %v715, %v714
  %v961 = vpack.c.b16 %v717, %v716
  %v962 = vpack.c.b16 %v719, %v718
  %v963 = vpack.c.b16 %v721, %v720
  %v964 = vpack.c.b16 %v723, %v722
  %v965 = vpack.c.b16 %v725, %v724
  %v966 = vpack.c.b16 %v727, %v726
  %v967 = vpack.c.b16 %v729, %v728
  %v968 = vpack.c.b16 %v731, %v730
  %v969 = vpack.c.b16 %v733, %v732
  %v970 = vpack.c.b16 %v735, %v734
  %v971 = vpack.c.b16 %v737, %v736
  %v972 = vpack.c.b16 %v739, %v738
  %v973 = vpack.c.b16 %v741, %v740
  %v974 = vpack.c.b16 %v743, %v742
  %v975 = vpack.c.b16 %v745, %v744
  %v976 = vpack.c.b16 %v747, %v746
  %v977 = vpack.c.b16 %v749, %v748
  %v978 = vpack.c.b16 %v751, %v750
  %v979 = vpack.c.b16 %v753, %v752
  %v980 = vpack.c.b16 %v755, %v754
  %v981 = vpack.c.b16 %v757, %v756
  %v982 = vpack.c.b16 %v759, %v758
  %v983 = vpack.c.b16 %v761, %v760
  %v984 = vpack.c.b16 %v763, %v762
  %v985 = vpack.c.b16 %v765, %v764
  %v986 = vpack.c.b16 %v767, %v766
  %v987 = vpack.c.b16 %v769, %v768
  %v988 = vpack.c.b16 %v771, %v770
  %v989 = vpack.c.b16 %v773, %v772
  %v990 = vpack.c.b16 %v775, %v774
  %v991 = vpack.c.b16 %v777, %v776
  %v992 = vpack.c.b16 %v779, %v778
  %v993 = vpack.c.b16 %v781, %v780
  %v994 = vpack.c.b16 %v783, %v782
  %v995 = vpack.c.b16 %v785, %v784
  %v996 = vpack.c.b16 %v787, %v786
  %v997 = vpack.c.b16 %v789, %v788
  %v998 = vpack.c.b16 %v791, %v790
  %v999 = vpack.c.b16 %v793, %v792
  %v1000 = vpack.c.b16 %v795, %v794
  %v1001 = vpack.c.b16 %v797, %v796
  %v1002 = vpack.c.b16 %v799, %v798
  %v1003 = vpack.c.b16 %v801, %v800
  %v1004 = vpack.c.b16 %v803, %v802
  %v1005 = vpack.c.b16 %v805, %v804
  %v1006 = vpack.c.b16 %v807, %v806
  %v1007 = vpack.c.b16 %v809, %v808
  %v1008 = vpack.c.b16 %v811, %v810
  %v1009 = vpack.c.b16 %v813, %v812
  %v1010 = vpack.c.b16 %v815, %v814
  %v1011 = vpack.c.b16 %v817, %v816
  %v1012 = vpack.c.b16 %v819, %v818
  %v1013 = vpack.c.b16 %v821, %v820
  %v1014 = vpack.c.b16 %v823, %v822
  %v1015 = vpack.c.b16 %v825, %v824
  %v1016 = vpack.c.b16 %v827, %v826
  %v1017 = vpack.c.b16 %v829, %v828
  %v1018 = vpack.c.b16 %v831, %v830
  %v1019 = vpack.c.b16 %v833, %v832
  %v1020 = vpack.c.b16 %v835, %v834
  %v1021 = vpack.c.b16 %v837, %v836
  %v1022 = vpack.c.b16 %v839, %v838
  %v1023 = vpack.c.b16 %v841, %v840
  %v1024 = vpack.c.b16 %v843, %v842
  %v1025 = vpack.c.b16 %v845, %v844
  %v1026 = vpack.c.b16 %v847, %v846
  %v1027 = vpack.c.b16 %v849, %v848
  %v1028 = vpack.c.b16 %v851, %v850
  %v1029 = vpack.c.b16 %v853, %v852
  %v1030 = vpack.c.b16 %v855, %v854
  %v1031 = vpack.c.b16 %v857, %v856
  %v1032 = vpack.c.b16 %v859, %v858
  %v1033 = vpack.c.b16 %v861, %v860
  %v1034 = vpack.c.b16 %v863, %v862
  %v1035 = vpack.c.b16 %v865, %v864
  %v1036 = vpack.c.b16 %v867, %v866
  %v1037 = vpack.c.b16 %v869, %v868
  %v1038 = vpack.c.b16 %v871, %v870
  %v1039 = vpack.c.b16 %v873, %v872
  %v1040 = vpack.c.b16 %v875, %v874
  %v1041 = vpack.c.b16 %v877, %v876
  %v1042 = vpack.c.b16 %v879, %v878
  %v1043 = vpack.c.b16 %v881, %v880
  %v1044 = vpack.c.b16 %v883, %v882
  %v1045 = vpack.c.b16 %v885, %v884
  %v1046 = vpack.c.b16 %v887, %v886
  %v1047 = vpack.c.b16 %v889, %v888
  %v1048 = vpack.c.b16 %v891, %v890
  %v1049 = vpack.c.b16 %v893, %v892
  %v1050 = vpack.c.b16 %v895, %v894
  %v1051 = vpack.c.b16 %v897, %v896
  %v1052 = vpack.c.b16 %v899, %v898
  %v1053 = vpack.c.b16 %v901, %v900
  %v1054 = vpack.c.b16 %v903, %v902
  %v1055 = vpack.c.b16 %v905, %v904
  %v1056 = vpack.c.b16 %v907, %v906
  %v1057 = vpack.c.b16 %v909, %v908
  %v1058 = vpack.c.b16 %v911, %v910
  %v1059 = vpack.c.b16 %v913, %v912
  %v1060 = vpack.c.b16 %v915, %v914
  %v1061 = vpack.c.b16 %v917, %v916
  %v1062 = vpack.c.b16 %v919, %v918
  %v1063 = vpack.c.b16 %v921, %v920
  %v1064 = vpack.c.b16 %v923, %v922
  %v1065 = vpack.c.b16 %v925, %v924
  %v1066 = vpack.c.b16 %v927, %v926
  %v1067 = vpack.c.b16 %v929, %v928
  %v1068 = vpack.c.b16 %v931, %v930
  %v1069 = vpack.c.b16 %v933, %v932
  %v1070 = vpack.c.b16 %v935, %v934
  %v1071 = vpack.c.b16 %v937, %v936
  %v1072 = vpack.c.b16 %v939, %v938
  %v1073 = vpack.c.b16 %v941, %v940
  %v1074 = vpack.c.b16 %v943, %v942
  %v1075 = vpack.c.b16 %v945, %v944
  %v1076 = vpack.c.b16 %v947, %v946
  %v1077 = vpack.c.b16 %v949, %v948
  %1206 = vmatprep.subr.bf16.mxu0 0
  %1207 = vmatpush1.bf16.msra.mxu0 %v957
  %1208 = vmatprep.subr.bf16.mxu0 0
  %1209 = vmatpush1.bf16.msra.mxu0 %v956
  %1210 = vmatprep.subr.bf16.mxu0 0
  %1211 = vmatpush1.bf16.msra.mxu0 %v955
  %1212 = vmatprep.subr.bf16.mxu0 0
  %1213 = vmatpush1.bf16.msra.mxu0 %v954
  %1214 = vmatprep.subr.bf16.mxu0 0
  %1215 = vmatpush1.bf16.msra.mxu0 %v953
  %1216 = vmatprep.subr.bf16.mxu0 0
  %1217 = vmatpush1.bf16.msra.mxu0 %v952
  %1218 = vmatprep.subr.bf16.mxu0 0
  %1219 = vmatpush1.bf16.msra.mxu0 %v951
  %1220 = vmatprep.subr.bf16.mxu0 0
  %1221 = vmatpush1.bf16.msra.mxu0 %v950
  %1222 = vmatprep.subr.bf16.mxu0 0
  %1223 = vmatpush2.bf16.msra.mxu0 %v965
  %1224 = vmatprep.subr.bf16.mxu0 0
  %1225 = vmatpush2.bf16.msra.mxu0 %v964
  %1226 = vmatprep.subr.bf16.mxu0 0
  %1227 = vmatpush2.bf16.msra.mxu0 %v963
  %1228 = vmatprep.subr.bf16.mxu0 0
  %1229 = vmatpush2.bf16.msra.mxu0 %v962
  %1230 = vmatprep.subr.bf16.mxu0 0
  %1231 = vmatpush2.bf16.msra.mxu0 %v961
  %1232 = vmatprep.subr.bf16.mxu0 0
  %1233 = vmatpush2.bf16.msra.mxu0 %v960
  %1234 = vmatprep.subr.bf16.mxu0 0
  %1235 = vmatpush2.bf16.msra.mxu0 %v959
  %1236 = vmatprep.subr.bf16.mxu0 0
  %1237 = vmatpush2.bf16.msra.mxu0 %v958
  %1238 = vmatprep.mubr.bf16.mxu0 %v375
  %1239 = vmatmul.mubr.bf16.gmra.mxu0 %v374
  %v1240 = vpop.f32.mrf.mxu0
  %v1241 = vadd.f32 %v300, %v1240
  %v1242 = vpop.f32.mrf.mxu0
  %v1243 = vpop.f32.mrf.mxu0
  %v1244 = vadd.f32 %v300, %v1243
  %v1245 = vpop.f32.mrf.mxu0
  %1246 = vmatprep.mubr.bf16.mxu0 %v391
  %1247 = vmatmul.mubr.bf16.gmra.mxu0 %v390
  %v1248 = vpop.f32.mrf.mxu0
  %v1249 = vadd.f32 %v300, %v1248
  %v1250 = vpop.f32.mrf.mxu0
  %v1251 = vpop.f32.mrf.mxu0
  %v1252 = vpop.f32.mrf.mxu0
  %1253 = vdwg.mxu0
  %1254 = vmatprep.subr.bf16.mxu0 0
  %1255 = vmatpush1.bf16.msra.mxu0 %v973
  %1256 = vmatprep.subr.bf16.mxu0 0
  %1257 = vmatpush1.bf16.msra.mxu0 %v972
  %1258 = vmatprep.subr.bf16.mxu0 0
  %1259 = vmatpush1.bf16.msra.mxu0 %v971
  %1260 = vmatprep.subr.bf16.mxu0 0
  %1261 = vmatpush1.bf16.msra.mxu0 %v970
  %1262 = vmatprep.subr.bf16.mxu0 0
  %1263 = vmatpush1.bf16.msra.mxu0 %v969
  %1264 = vmatprep.subr.bf16.mxu0 0
  %1265 = vmatpush1.bf16.msra.mxu0 %v968
  %1266 = vmatprep.subr.bf16.mxu0 0
  %1267 = vmatpush1.bf16.msra.mxu0 %v967
  %1268 = vmatprep.subr.bf16.mxu0 0
  %1269 = vmatpush1.bf16.msra.mxu0 %v966
  %1270 = vmatprep.subr.bf16.mxu0 0
  %1271 = vmatpush2.bf16.msra.mxu0 %v981
  %1272 = vmatprep.subr.bf16.mxu0 0
  %1273 = vmatpush2.bf16.msra.mxu0 %v980
  %1274 = vmatprep.subr.bf16.mxu0 0
  %1275 = vmatpush2.bf16.msra.mxu0 %v979
  %1276 = vmatprep.subr.bf16.mxu0 0
  %1277 = vmatpush2.bf16.msra.mxu0 %v978
  %1278 = vmatprep.subr.bf16.mxu0 0
  %1279 = vmatpush2.bf16.msra.mxu0 %v977
  %1280 = vmatprep.subr.bf16.mxu0 0
  %1281 = vmatpush2.bf16.msra.mxu0 %v976
  %1282 = vmatprep.subr.bf16.mxu0 0
  %1283 = vmatpush2.bf16.msra.mxu0 %v975
  %1284 = vmatprep.subr.bf16.mxu0 0
  %1285 = vmatpush2.bf16.msra.mxu0 %v974
  %1286 = vmatprep.mubr.bf16.mxu0 %v377
  %1287 = vmatmul.mubr.bf16.gmra.mxu0 %v376
  %v1288 = vpop.f32.mrf.mxu0
  %v1289 = vadd.f32 %v1241, %v1288
  %v1290 = vpop.f32.mrf.mxu0
  %v1291 = vpop.f32.mrf.mxu0
  %v1292 = vadd.f32 %v1244, %v1291
  %v1293 = vpop.f32.mrf.mxu0
  %1294 = vmatprep.mubr.bf16.mxu0 %v393
  %1295 = vmatmul.mubr.bf16.gmra.mxu0 %v392
  %v1296 = vpop.f32.mrf.mxu0
  %v1297 = vadd.f32 %v1249, %v1296
  %v1298 = vpop.f32.mrf.mxu0
  %v1299 = vpop.f32.mrf.mxu0
  %v1300 = vpop.f32.mrf.mxu0
  %1301 = vdwg.mxu0
  %1302 = vmatprep.subr.bf16.mxu0 0
  %1303 = vmatpush1.bf16.msra.mxu0 %v989
  %1304 = vmatprep.subr.bf16.mxu0 0
  %1305 = vmatpush1.bf16.msra.mxu0 %v988
  %1306 = vmatprep.subr.bf16.mxu0 0
  %1307 = vmatpush1.bf16.msra.mxu0 %v987
  %1308 = vmatprep.subr.bf16.mxu0 0
  %1309 = vmatpush1.bf16.msra.mxu0 %v986
  %1310 = vmatprep.subr.bf16.mxu0 0
  %1311 = vmatpush1.bf16.msra.mxu0 %v985
  %1312 = vmatprep.subr.bf16.mxu0 0
  %1313 = vmatpush1.bf16.msra.mxu0 %v984
  %1314 = vmatprep.subr.bf16.mxu0 0
  %1315 = vmatpush1.bf16.msra.mxu0 %v983
  %1316 = vmatprep.subr.bf16.mxu0 0
  %1317 = vmatpush1.bf16.msra.mxu0 %v982
  %1318 = vmatprep.subr.bf16.mxu0 0
  %1319 = vmatpush2.bf16.msra.mxu0 %v997
  %1320 = vmatprep.subr.bf16.mxu0 0
  %1321 = vmatpush2.bf16.msra.mxu0 %v996
  %1322 = vmatprep.subr.bf16.mxu0 0
  %1323 = vmatpush2.bf16.msra.mxu0 %v995
  %1324 = vmatprep.subr.bf16.mxu0 0
  %1325 = vmatpush2.bf16.msra.mxu0 %v994
  %1326 = vmatprep.subr.bf16.mxu0 0
  %1327 = vmatpush2.bf16.msra.mxu0 %v993
  %1328 = vmatprep.subr.bf16.mxu0 0
  %1329 = vmatpush2.bf16.msra.mxu0 %v992
  %1330 = vmatprep.subr.bf16.mxu0 0
  %1331 = vmatpush2.bf16.msra.mxu0 %v991
  %1332 = vmatprep.subr.bf16.mxu0 0
  %1333 = vmatpush2.bf16.msra.mxu0 %v990
  %1334 = vmatprep.mubr.bf16.mxu0 %v379
  %1335 = vmatmul.mubr.bf16.gmra.mxu0 %v378
  %v1336 = vpop.f32.mrf.mxu0
  %v1337 = vadd.f32 %v1289, %v1336
  %v1338 = vpop.f32.mrf.mxu0
  %v1339 = vpop.f32.mrf.mxu0
  %v1340 = vadd.f32 %v1292, %v1339
  %v1341 = vpop.f32.mrf.mxu0
  %1342 = vmatprep.mubr.bf16.mxu0 %v395
  %1343 = vmatmul.mubr.bf16.gmra.mxu0 %v394
  %v1344 = vpop.f32.mrf.mxu0
  %v1345 = vadd.f32 %v1297, %v1344
  %v1346 = vpop.f32.mrf.mxu0
  %v1347 = vpop.f32.mrf.mxu0
  %v1348 = vpop.f32.mrf.mxu0
  %1349 = vdwg.mxu0
  %1350 = vmatprep.subr.bf16.mxu0 0
  %1351 = vmatpush1.bf16.msra.mxu0 %v1005
  %1352 = vmatprep.subr.bf16.mxu0 0
  %1353 = vmatpush1.bf16.msra.mxu0 %v1004
  %1354 = vmatprep.subr.bf16.mxu0 0
  %1355 = vmatpush1.bf16.msra.mxu0 %v1003
  %1356 = vmatprep.subr.bf16.mxu0 0
  %1357 = vmatpush1.bf16.msra.mxu0 %v1002
  %1358 = vmatprep.subr.bf16.mxu0 0
  %1359 = vmatpush1.bf16.msra.mxu0 %v1001
  %1360 = vmatprep.subr.bf16.mxu0 0
  %1361 = vmatpush1.bf16.msra.mxu0 %v1000
  %1362 = vmatprep.subr.bf16.mxu0 0
  %1363 = vmatpush1.bf16.msra.mxu0 %v999
  %1364 = vmatprep.subr.bf16.mxu0 0
  %1365 = vmatpush1.bf16.msra.mxu0 %v998
  %1366 = vmatprep.subr.bf16.mxu0 0
  %1367 = vmatpush2.bf16.msra.mxu0 %v1013
  %1368 = vmatprep.subr.bf16.mxu0 0
  %1369 = vmatpush2.bf16.msra.mxu0 %v1012
  %1370 = vmatprep.subr.bf16.mxu0 0
  %1371 = vmatpush2.bf16.msra.mxu0 %v1011
  %1372 = vmatprep.subr.bf16.mxu0 0
  %1373 = vmatpush2.bf16.msra.mxu0 %v1010
  %1374 = vmatprep.subr.bf16.mxu0 0
  %1375 = vmatpush2.bf16.msra.mxu0 %v1009
  %1376 = vmatprep.subr.bf16.mxu0 0
  %1377 = vmatpush2.bf16.msra.mxu0 %v1008
  %1378 = vmatprep.subr.bf16.mxu0 0
  %1379 = vmatpush2.bf16.msra.mxu0 %v1007
  %1380 = vmatprep.subr.bf16.mxu0 0
  %1381 = vmatpush2.bf16.msra.mxu0 %v1006
  %1382 = vmatprep.mubr.bf16.mxu0 %v381
  %1383 = vmatmul.mubr.bf16.gmra.mxu0 %v380
  %v1384 = vpop.f32.mrf.mxu0
  %v1385 = vadd.f32 %v1337, %v1384
  %v1386 = vpop.f32.mrf.mxu0
  %v1387 = vpop.f32.mrf.mxu0
  %v1388 = vadd.f32 %v1340, %v1387
  %v1389 = vpop.f32.mrf.mxu0
  %1390 = vmatprep.mubr.bf16.mxu0 %v397
  %1391 = vmatmul.mubr.bf16.gmra.mxu0 %v396
  %v1392 = vpop.f32.mrf.mxu0
  %v1393 = vadd.f32 %v1345, %v1392
  %v1394 = vpop.f32.mrf.mxu0
  %v1395 = vpop.f32.mrf.mxu0
  %v1396 = vpop.f32.mrf.mxu0
  %1397 = vdwg.mxu0
  %1398 = vmatprep.subr.bf16.mxu0 0
  %1399 = vmatpush1.bf16.msra.mxu0 %v1021
  %1400 = vmatprep.subr.bf16.mxu0 0
  %1401 = vmatpush1.bf16.msra.mxu0 %v1020
  %1402 = vmatprep.subr.bf16.mxu0 0
  %1403 = vmatpush1.bf16.msra.mxu0 %v1019
  %1404 = vmatprep.subr.bf16.mxu0 0
  %1405 = vmatpush1.bf16.msra.mxu0 %v1018
  %1406 = vmatprep.subr.bf16.mxu0 0
  %1407 = vmatpush1.bf16.msra.mxu0 %v1017
  %1408 = vmatprep.subr.bf16.mxu0 0
  %1409 = vmatpush1.bf16.msra.mxu0 %v1016
  %1410 = vmatprep.subr.bf16.mxu0 0
  %1411 = vmatpush1.bf16.msra.mxu0 %v1015
  %1412 = vmatprep.subr.bf16.mxu0 0
  %1413 = vmatpush1.bf16.msra.mxu0 %v1014
  %1414 = vmatprep.subr.bf16.mxu0 0
  %1415 = vmatpush2.bf16.msra.mxu0 %v1029
  %1416 = vmatprep.subr.bf16.mxu0 0
  %1417 = vmatpush2.bf16.msra.mxu0 %v1028
  %1418 = vmatprep.subr.bf16.mxu0 0
  %1419 = vmatpush2.bf16.msra.mxu0 %v1027
  %1420 = vmatprep.subr.bf16.mxu0 0
  %1421 = vmatpush2.bf16.msra.mxu0 %v1026
  %1422 = vmatprep.subr.bf16.mxu0 0
  %1423 = vmatpush2.bf16.msra.mxu0 %v1025
  %1424 = vmatprep.subr.bf16.mxu0 0
  %1425 = vmatpush2.bf16.msra.mxu0 %v1024
  %1426 = vmatprep.subr.bf16.mxu0 0
  %1427 = vmatpush2.bf16.msra.mxu0 %v1023
  %1428 = vmatprep.subr.bf16.mxu0 0
  %1429 = vmatpush2.bf16.msra.mxu0 %v1022
  %1430 = vmatprep.mubr.bf16.mxu0 %v383
  %1431 = vmatmul.mubr.bf16.gmra.mxu0 %v382
  %v1432 = vpop.f32.mrf.mxu0
  %v1433 = vadd.f32 %v1385, %v1432
  %v1434 = vpop.f32.mrf.mxu0
  %v1435 = vpop.f32.mrf.mxu0
  %v1436 = vadd.f32 %v1388, %v1435
  %v1437 = vpop.f32.mrf.mxu0
  %1438 = vmatprep.mubr.bf16.mxu0 %v399
  %1439 = vmatmul.mubr.bf16.gmra.mxu0 %v398
  %v1440 = vpop.f32.mrf.mxu0
  %v1441 = vadd.f32 %v1393, %v1440
  %v1442 = vpop.f32.mrf.mxu0
  %v1443 = vpop.f32.mrf.mxu0
  %v1444 = vpop.f32.mrf.mxu0
  %1445 = vdwg.mxu0
  %1446 = vmatprep.subr.bf16.mxu0 0
  %1447 = vmatpush1.bf16.msra.mxu0 %v1037
  %1448 = vmatprep.subr.bf16.mxu0 0
  %1449 = vmatpush1.bf16.msra.mxu0 %v1036
  %1450 = vmatprep.subr.bf16.mxu0 0
  %1451 = vmatpush1.bf16.msra.mxu0 %v1035
  %1452 = vmatprep.subr.bf16.mxu0 0
  %1453 = vmatpush1.bf16.msra.mxu0 %v1034
  %1454 = vmatprep.subr.bf16.mxu0 0
  %1455 = vmatpush1.bf16.msra.mxu0 %v1033
  %1456 = vmatprep.subr.bf16.mxu0 0
  %1457 = vmatpush1.bf16.msra.mxu0 %v1032
  %1458 = vmatprep.subr.bf16.mxu0 0
  %1459 = vmatpush1.bf16.msra.mxu0 %v1031
  %1460 = vmatprep.subr.bf16.mxu0 0
  %1461 = vmatpush1.bf16.msra.mxu0 %v1030
  %1462 = vmatprep.subr.bf16.mxu0 0
  %1463 = vmatpush2.bf16.msra.mxu0 %v1045
  %1464 = vmatprep.subr.bf16.mxu0 0
  %1465 = vmatpush2.bf16.msra.mxu0 %v1044
  %1466 = vmatprep.subr.bf16.mxu0 0
  %1467 = vmatpush2.bf16.msra.mxu0 %v1043
  %1468 = vmatprep.subr.bf16.mxu0 0
  %1469 = vmatpush2.bf16.msra.mxu0 %v1042
  %1470 = vmatprep.subr.bf16.mxu0 0
  %1471 = vmatpush2.bf16.msra.mxu0 %v1041
  %1472 = vmatprep.subr.bf16.mxu0 0
  %1473 = vmatpush2.bf16.msra.mxu0 %v1040
  %1474 = vmatprep.subr.bf16.mxu0 0
  %1475 = vmatpush2.bf16.msra.mxu0 %v1039
  %1476 = vmatprep.subr.bf16.mxu0 0
  %1477 = vmatpush2.bf16.msra.mxu0 %v1038
  %1478 = vmatprep.mubr.bf16.mxu0 %v385
  %1479 = vmatmul.mubr.bf16.gmra.mxu0 %v384
  %v1480 = vpop.f32.mrf.mxu0
  %v1481 = vadd.f32 %v1433, %v1480
  %v1482 = vpop.f32.mrf.mxu0
  %v1483 = vpop.f32.mrf.mxu0
  %v1484 = vadd.f32 %v1436, %v1483
  %v1485 = vpop.f32.mrf.mxu0
  %1486 = vmatprep.mubr.bf16.mxu0 %v401
  %1487 = vmatmul.mubr.bf16.gmra.mxu0 %v400
  %v1488 = vpop.f32.mrf.mxu0
  %v1489 = vadd.f32 %v1441, %v1488
  %v1490 = vpop.f32.mrf.mxu0
  %v1491 = vpop.f32.mrf.mxu0
  %v1492 = vpop.f32.mrf.mxu0
  %1493 = vdwg.mxu0
  %1494 = vmatprep.subr.bf16.mxu0 0
  %1495 = vmatpush1.bf16.msra.mxu0 %v1053
  %1496 = vmatprep.subr.bf16.mxu0 0
  %1497 = vmatpush1.bf16.msra.mxu0 %v1052
  %1498 = vmatprep.subr.bf16.mxu0 0
  %1499 = vmatpush1.bf16.msra.mxu0 %v1051
  %1500 = vmatprep.subr.bf16.mxu0 0
  %1501 = vmatpush1.bf16.msra.mxu0 %v1050
  %1502 = vmatprep.subr.bf16.mxu0 0
  %1503 = vmatpush1.bf16.msra.mxu0 %v1049
  %1504 = vmatprep.subr.bf16.mxu0 0
  %1505 = vmatpush1.bf16.msra.mxu0 %v1048
  %1506 = vmatprep.subr.bf16.mxu0 0
  %1507 = vmatpush1.bf16.msra.mxu0 %v1047
  %1508 = vmatprep.subr.bf16.mxu0 0
  %1509 = vmatpush1.bf16.msra.mxu0 %v1046
  %1510 = vmatprep.subr.bf16.mxu0 0
  %1511 = vmatpush2.bf16.msra.mxu0 %v1061
  %1512 = vmatprep.subr.bf16.mxu0 0
  %1513 = vmatpush2.bf16.msra.mxu0 %v1060
  %1514 = vmatprep.subr.bf16.mxu0 0
  %1515 = vmatpush2.bf16.msra.mxu0 %v1059
  %1516 = vmatprep.subr.bf16.mxu0 0
  %1517 = vmatpush2.bf16.msra.mxu0 %v1058
  %1518 = vmatprep.subr.bf16.mxu0 0
  %1519 = vmatpush2.bf16.msra.mxu0 %v1057
  %1520 = vmatprep.subr.bf16.mxu0 0
  %1521 = vmatpush2.bf16.msra.mxu0 %v1056
  %1522 = vmatprep.subr.bf16.mxu0 0
  %1523 = vmatpush2.bf16.msra.mxu0 %v1055
  %1524 = vmatprep.subr.bf16.mxu0 0
  %1525 = vmatpush2.bf16.msra.mxu0 %v1054
  %1526 = vmatprep.mubr.bf16.mxu0 %v387
  %1527 = vmatmul.mubr.bf16.gmra.mxu0 %v386
  %v1528 = vpop.f32.mrf.mxu0
  %v1529 = vadd.f32 %v1481, %v1528
  %v1530 = vpop.f32.mrf.mxu0
  %v1531 = vpop.f32.mrf.mxu0
  %v1532 = vadd.f32 %v1484, %v1531
  %v1533 = vpop.f32.mrf.mxu0
  %1534 = vmatprep.mubr.bf16.mxu0 %v403
  %1535 = vmatmul.mubr.bf16.gmra.mxu0 %v402
  %v1536 = vpop.f32.mrf.mxu0
  %v1537 = vadd.f32 %v1489, %v1536
  %v1538 = vpop.f32.mrf.mxu0
  %v1539 = vpop.f32.mrf.mxu0
  %v1540 = vpop.f32.mrf.mxu0
  %1541 = vdwg.mxu0
  %1542 = vmatprep.subr.bf16.mxu0 0
  %1543 = vmatpush1.bf16.msra.mxu0 %v1069
  %1544 = vmatprep.subr.bf16.mxu0 0
  %1545 = vmatpush1.bf16.msra.mxu0 %v1068
  %1546 = vmatprep.subr.bf16.mxu0 0
  %1547 = vmatpush1.bf16.msra.mxu0 %v1067
  %1548 = vmatprep.subr.bf16.mxu0 0
  %1549 = vmatpush1.bf16.msra.mxu0 %v1066
  %1550 = vmatprep.subr.bf16.mxu0 0
  %1551 = vmatpush1.bf16.msra.mxu0 %v1065
  %1552 = vmatprep.subr.bf16.mxu0 0
  %1553 = vmatpush1.bf16.msra.mxu0 %v1064
  %1554 = vmatprep.subr.bf16.mxu0 0
  %1555 = vmatpush1.bf16.msra.mxu0 %v1063
  %1556 = vmatprep.subr.bf16.mxu0 0
  %1557 = vmatpush1.bf16.msra.mxu0 %v1062
  %1558 = vmatprep.subr.bf16.mxu0 0
  %1559 = vmatpush2.bf16.msra.mxu0 %v1077
  %1560 = vmatprep.subr.bf16.mxu0 0
  %1561 = vmatpush2.bf16.msra.mxu0 %v1076
  %1562 = vmatprep.subr.bf16.mxu0 0
  %1563 = vmatpush2.bf16.msra.mxu0 %v1075
  %1564 = vmatprep.subr.bf16.mxu0 0
  %1565 = vmatpush2.bf16.msra.mxu0 %v1074
  %1566 = vmatprep.subr.bf16.mxu0 0
  %1567 = vmatpush2.bf16.msra.mxu0 %v1073
  %1568 = vmatprep.subr.bf16.mxu0 0
  %1569 = vmatpush2.bf16.msra.mxu0 %v1072
  %1570 = vmatprep.subr.bf16.mxu0 0
  %1571 = vmatpush2.bf16.msra.mxu0 %v1071
  %1572 = vmatprep.subr.bf16.mxu0 0
  %1573 = vmatpush2.bf16.msra.mxu0 %v1070
  %1574 = vmatprep.mubr.bf16.mxu0 %v389
  %1575 = vmatmul.mubr.bf16.gmra.mxu0 %v388
  %v1576 = vpop.f32.mrf.mxu0
  %v1577 = vadd.f32 %v1529, %v1576
  %v1578 = vpop.f32.mrf.mxu0
  %v1579 = vpop.f32.mrf.mxu0
  %v1580 = vadd.f32 %v1532, %v1579
  %v1581 = vpop.f32.mrf.mxu0
  %1582 = vmatprep.mubr.bf16.mxu0 %v405
  %1583 = vmatmul.mubr.bf16.gmra.mxu0 %v404
  %v1584 = vpop.f32.mrf.mxu0
  %v1585 = vadd.f32 %v1537, %v1584
  %v1586 = vpop.f32.mrf.mxu0
  %v1587 = vpop.f32.mrf.mxu0
  %v1588 = vpop.f32.mrf.mxu0
  %1589 = vdwg.mxu0
  %v1590 = vmax.f32 %v1577, 0.0
  %v1591 = vmax.f32 %v1580, 0.0
  %v1592 = vmax.f32 %v1585, 0.0
  %v1593 = vpack.c.bf16 %v1591, %v1590
  %v1594 = vpack.c.bf16 %v1592, %v1592
  %v1597 = vunpack.c.l.b16 %v1593
  %v1598 = vunpack.c.h.b16 %v1593
  %v1599 = vunpack.c.l.b16 %v1594
  %v1600 = vpack.c.b16 %v1597, %v1597
  %v1601 = vpack.c.b16 %v1598, %v1598
  %v1602 = vpack.c.b16 %v1599, %v1599
  %1606 = vst [vmem:[%s3] sm:$0xf] %v1600
  %1607 = vst [vmem:[%s3 + $0x4] sm:$0xf] %v1601
  %1608 = vst [vmem:[%s3 + $0x8] sm:$0xf] %v1602
  // Predicated region
  $region14: #{network_forward.4} parent=0 // pred_check
    _
  $region15: #{network_forward.4} parent=0 // pred_check_branch
    %1610 = sbr.rel (0) target = $region17
  $region16: #{network_forward.4} parent=0 // pred_region
    _
  $region17: #{network_forward.4} parent=0 // pred_fallthru
    _
  // Predicated region
  $region18: #{network_forward.4} parent=0 // pred_check
    _
  $region19: #{network_forward.4} parent=0 // pred_check_branch
    %1612 = sbr.rel (0) target = $region21
  $region20: #{network_forward.4} parent=0 // pred_region
    _
  $region21: #{network_forward.4} parent=0 // pred_fallthru
    _

// kernel: network_forward.5
$region0: #{network_forward.5}
  #allocation0 [shape = 'u32[]', space=smem, size = 0x4, offset = 0x4, fixed_abs, tag = 'smem constant byte address 0x4 - core index']
  #allocation1 [shape = 'u32[144,128]{1,0:T(1,128)}', space=vmem, size = 0x12000, scoped, tag = 'internal scratch']
  %s0 = inlined_call_operand.vmem [shape: bf16[2,1152], index: 0, kind: input, shape index: {}]
  %s1 = inlined_call_operand.vmem [shape: bf16[1152,64], index: 1, kind: input, shape index: {}]
  %s2 = inlined_call_operand.vmem [shape: f32[1,64], index: 2, kind: input, shape index: {}]
  %s3 = inlined_call_operand.vmem [shape: bf16[64,512], index: 3, kind: input, shape index: {}]
  %s4 = inlined_call_operand.vmem [shape: f32[1,512], index: 4, kind: input, shape index: {}]
  %s5 = inlined_call_operand.vmem [shape: bf16[512,128], index: 5, kind: input, shape index: {}]
  %s6 = inlined_call_operand.vmem [shape: f32[1,128], index: 6, kind: input, shape index: {}]
  %s7 = inlined_call_operand.hbm [shape: f32[2,128], index: 7, kind: output, shape index: {}]
  %s8 = sld [smem:[#allocation0]]
  $region38: #{network_forward.5} parent=0
    _
  %s10 = ssub.s32 1, %s8
  %s11 = scalar_select 0, %s10, %s8
  $region1: #{network_forward.5} parent=0
    #allocation2 [shape = 'u8[4096]{0}', space=vmem, size = 0x1000, scoped, tag = 'output window, operand 0, single buffered']
    #allocation3 [shape = 's32[1]{0}', space=sflag, size = 0x4, scoped, tag = 'scoped memory for network_forward.5']
    %12 = vsyncpa [#allocation3], 0
    // Predicated region
    $region2: #{network_forward.5} parent=1 // pred_check
      _
    $region3: #{network_forward.5} parent=1 // pred_check_branch
      %14 = sbr.rel (0) target = $region5
    $region4: #{network_forward.5} parent=1 // pred_region
      _
    $region5: #{network_forward.5} parent=1 // pred_fallthru
      _
    // Predicated region
    $region6: #{network_forward.5} parent=1 // pred_check
      _
    $region7: #{network_forward.5} parent=1 // pred_check_branch
      %16 = sbr.rel (0) target = $region9
    $region8: #{network_forward.5} parent=1 // pred_region
      _
    $region9: #{network_forward.5} parent=1 // pred_fallthru
      _
    // Predicated region
    $region10: #{network_forward.5} parent=1 // pred_check
      _
    $region11: #{network_forward.5} parent=1 // pred_check_branch
      %18 = sbr.rel (0) target = $region13
    $region12: #{network_forward.5} parent=1 // pred_region
      _
    $region13: #{network_forward.5} parent=1 // pred_fallthru
      _
    // Predicated region
    $region14: #{network_forward.5} parent=1 // pred_check
      _
    $region15: #{network_forward.5} parent=1 // pred_check_branch
      %20 = sbr.rel (0) target = $region17
    $region16: #{network_forward.5} parent=1 // pred_region
      _
    $region17: #{network_forward.5} parent=1 // pred_fallthru
      _
    // Predicated region
    $region18: #{network_forward.5} parent=1 // pred_check
      _
    $region19: #{network_forward.5} parent=1 // pred_check_branch
      %22 = sbr.rel (0) target = $region21
    $region20: #{network_forward.5} parent=1 // pred_region
      _
    $region21: #{network_forward.5} parent=1 // pred_fallthru
      _
    // Predicated region
    $region22: #{network_forward.5} parent=1 // pred_check
      _
    $region23: #{network_forward.5} parent=1 // pred_check_branch
      %24 = sbr.rel (0) target = $region25
    $region24: #{network_forward.5} parent=1 // pred_region
      _
    $region25: #{network_forward.5} parent=1 // pred_fallthru
      _
    // Predicated region
    $region26: #{network_forward.5} parent=1 // pred_check
      _
    $region27: #{network_forward.5} parent=1 // pred_check_branch
      %26 = sbr.rel (0) target = $region29
    $region28: #{network_forward.5} parent=1 // pred_region
      _
    $region29: #{network_forward.5} parent=1 // pred_fallthru
      _
    %v28 = vld [vmem:[%s0] sm:$0xff]
    %v29 = vld [vmem:[%s0 + $0x8] sm:$0x1]
    %v30 = vld [vmem:[%s0 + $0x9] sm:$0xff]
    %v31 = vld [vmem:[%s0 + $0x11] sm:$0x1]
    %v32 = vld [vmem:[%s0 + $0x12] sm:$0xff]
    %v33 = vld [vmem:[%s0 + $0x1a] sm:$0x1]
    %v34 = vld [vmem:[%s0 + $0x1b] sm:$0xff]
    %v35 = vld [vmem:[%s0 + $0x23] sm:$0x1]
    %v36 = vld [vmem:[%s1] sm:$0xf]
    %v37 = vld [vmem:[%s1 + $0x4] sm:$0xf]
    %v38 = vld [vmem:[%s1 + $0x8] sm:$0xf]
    %v39 = vld [vmem:[%s1 + $0xc] sm:$0xf]
    %v40 = vld [vmem:[%s1 + $0x10] sm:$0xf]
    %v41 = vld [vmem:[%s1 + $0x14] sm:$0xf]
    %v42 = vld [vmem:[%s1 + $0x18] sm:$0xf]
    %v43 = vld [vmem:[%s1 + $0x1c] sm:$0xf]
    %v44 = vld [vmem:[%s1 + $0x20] sm:$0xf]
    %v45 = vld [vmem:[%s1 + $0x24] sm:$0xf]
    %v46 = vld [vmem:[%s1 + $0x28] sm:$0xf]
    %v47 = vld [vmem:[%s1 + $0x2c] sm:$0xf]
    %v48 = vld [vmem:[%s1 + $0x30] sm:$0xf]
    %v49 = vld [vmem:[%s1 + $0x34] sm:$0xf]
    %v50 = vld [vmem:[%s1 + $0x38] sm:$0xf]
    %v51 = vld [vmem:[%s1 + $0x3c] sm:$0xf]
    %v52 = vld [vmem:[%s1 + $0x40] sm:$0xf]
    %v53 = vld [vmem:[%s1 + $0x44] sm:$0xf]
    %v54 = vld [vmem:[%s1 + $0x48] sm:$0xf]
    %v55 = vld [vmem:[%s1 + $0x4c] sm:$0xf]
    %v56 = vld [vmem:[%s1 + $0x50] sm:$0xf]
    %v57 = vld [vmem:[%s1 + $0x54] sm:$0xf]
    %v58 = vld [vmem:[%s1 + $0x58] sm:$0xf]
    %v59 = vld [vmem:[%s1 + $0x5c] sm:$0xf]
    %v60 = vld [vmem:[%s1 + $0x60] sm:$0xf]
    %v61 = vld [vmem:[%s1 + $0x64] sm:$0xf]
    %v62 = vld [vmem:[%s1 + $0x68] sm:$0xf]
    %v63 = vld [vmem:[%s1 + $0x6c] sm:$0xf]
    %v64 = vld [vmem:[%s1 + $0x70] sm:$0xf]
    %v65 = vld [vmem:[%s1 + $0x74] sm:$0xf]
    %v66 = vld [vmem:[%s1 + $0x78] sm:$0xf]
    %v67 = vld [vmem:[%s1 + $0x7c] sm:$0xf]
    %v68 = vld [vmem:[%s1 + $0x80] sm:$0xf]
    %v69 = vld [vmem:[%s1 + $0x84] sm:$0xf]
    %v70 = vld [vmem:[%s1 + $0x88] sm:$0xf]
    %v71 = vld [vmem:[%s1 + $0x8c] sm:$0xf]
    %v72 = vld [vmem:[%s1 + $0x90] sm:$0xf]
    %v73 = vld [vmem:[%s1 + $0x94] sm:$0xf]
    %v74 = vld [vmem:[%s1 + $0x98] sm:$0xf]
    %v75 = vld [vmem:[%s1 + $0x9c] sm:$0xf]
    %v76 = vld [vmem:[%s1 + $0xa0] sm:$0xf]
    %v77 = vld [vmem:[%s1 + $0xa4] sm:$0xf]
    %v78 = vld [vmem:[%s1 + $0xa8] sm:$0xf]
    %v79 = vld [vmem:[%s1 + $0xac] sm:$0xf]
    %v80 = vld [vmem:[%s1 + $0xb0] sm:$0xf]
    %v81 = vld [vmem:[%s1 + $0xb4] sm:$0xf]
    %v82 = vld [vmem:[%s1 + $0xb8] sm:$0xf]
    %v83 = vld [vmem:[%s1 + $0xbc] sm:$0xf]
    %v84 = vld [vmem:[%s1 + $0xc0] sm:$0xf]
    %v85 = vld [vmem:[%s1 + $0xc4] sm:$0xf]
    %v86 = vld [vmem:[%s1 + $0xc8] sm:$0xf]
    %v87 = vld [vmem:[%s1 + $0xcc] sm:$0xf]
    %v88 = vld [vmem:[%s1 + $0xd0] sm:$0xf]
    %v89 = vld [vmem:[%s1 + $0xd4] sm:$0xf]
    %v90 = vld [vmem:[%s1 + $0xd8] sm:$0xf]
    %v91 = vld [vmem:[%s1 + $0xdc] sm:$0xf]
    %v92 = vld [vmem:[%s1 + $0xe0] sm:$0xf]
    %v93 = vld [vmem:[%s1 + $0xe4] sm:$0xf]
    %v94 = vld [vmem:[%s1 + $0xe8] sm:$0xf]
    %v95 = vld [vmem:[%s1 + $0xec] sm:$0xf]
    %v96 = vld [vmem:[%s1 + $0xf0] sm:$0xf]
    %v97 = vld [vmem:[%s1 + $0xf4] sm:$0xf]
    %v98 = vld [vmem:[%s1 + $0xf8] sm:$0xf]
    %v99 = vld [vmem:[%s1 + $0xfc] sm:$0xf]
    %v100 = vld [vmem:[%s1 + $0x100] sm:$0xf]
    %v101 = vld [vmem:[%s1 + $0x104] sm:$0xf]
    %v102 = vld [vmem:[%s1 + $0x108] sm:$0xf]
    %v103 = vld [vmem:[%s1 + $0x10c] sm:$0xf]
    %v104 = vld [vmem:[%s1 + $0x110] sm:$0xf]
    %v105 = vld [vmem:[%s1 + $0x114] sm:$0xf]
    %v106 = vld [vmem:[%s1 + $0x118] sm:$0xf]
    %v107 = vld [vmem:[%s1 + $0x11c] sm:$0xf]
    %v108 = vld [vmem:[%s1 + $0x120] sm:$0xf]
    %v109 = vld [vmem:[%s1 + $0x124] sm:$0xf]
    %v110 = vld [vmem:[%s1 + $0x128] sm:$0xf]
    %v111 = vld [vmem:[%s1 + $0x12c] sm:$0xf]
    %v112 = vld [vmem:[%s1 + $0x130] sm:$0xf]
    %v113 = vld [vmem:[%s1 + $0x134] sm:$0xf]
    %v114 = vld [vmem:[%s1 + $0x138] sm:$0xf]
    %v115 = vld [vmem:[%s1 + $0x13c] sm:$0xf]
    %v116 = vld [vmem:[%s1 + $0x140] sm:$0xf]
    %v117 = vld [vmem:[%s1 + $0x144] sm:$0xf]
    %v118 = vld [vmem:[%s1 + $0x148] sm:$0xf]
    %v119 = vld [vmem:[%s1 + $0x14c] sm:$0xf]
    %v120 = vld [vmem:[%s1 + $0x150] sm:$0xf]
    %v121 = vld [vmem:[%s1 + $0x154] sm:$0xf]
    %v122 = vld [vmem:[%s1 + $0x158] sm:$0xf]
    %v123 = vld [vmem:[%s1 + $0x15c] sm:$0xf]
    %v124 = vld [vmem:[%s1 + $0x160] sm:$0xf]
    %v125 = vld [vmem:[%s1 + $0x164] sm:$0xf]
    %v126 = vld [vmem:[%s1 + $0x168] sm:$0xf]
    %v127 = vld [vmem:[%s1 + $0x16c] sm:$0xf]
    %v128 = vld [vmem:[%s1 + $0x170] sm:$0xf]
    %v129 = vld [vmem:[%s1 + $0x174] sm:$0xf]
    %v130 = vld [vmem:[%s1 + $0x178] sm:$0xf]
    %v131 = vld [vmem:[%s1 + $0x17c] sm:$0xf]
    %v132 = vld [vmem:[%s1 + $0x180] sm:$0xf]
    %v133 = vld [vmem:[%s1 + $0x184] sm:$0xf]
    %v134 = vld [vmem:[%s1 + $0x188] sm:$0xf]
    %v135 = vld [vmem:[%s1 + $0x18c] sm:$0xf]
    %v136 = vld [vmem:[%s1 + $0x190] sm:$0xf]
    %v137 = vld [vmem:[%s1 + $0x194] sm:$0xf]
    %v138 = vld [vmem:[%s1 + $0x198] sm:$0xf]
    %v139 = vld [vmem:[%s1 + $0x19c] sm:$0xf]
    %v140 = vld [vmem:[%s1 + $0x1a0] sm:$0xf]
    %v141 = vld [vmem:[%s1 + $0x1a4] sm:$0xf]
    %v142 = vld [vmem:[%s1 + $0x1a8] sm:$0xf]
    %v143 = vld [vmem:[%s1 + $0x1ac] sm:$0xf]
    %v144 = vld [vmem:[%s1 + $0x1b0] sm:$0xf]
    %v145 = vld [vmem:[%s1 + $0x1b4] sm:$0xf]
    %v146 = vld [vmem:[%s1 + $0x1b8] sm:$0xf]
    %v147 = vld [vmem:[%s1 + $0x1bc] sm:$0xf]
    %v148 = vld [vmem:[%s1 + $0x1c0] sm:$0xf]
    %v149 = vld [vmem:[%s1 + $0x1c4] sm:$0xf]
    %v150 = vld [vmem:[%s1 + $0x1c8] sm:$0xf]
    %v151 = vld [vmem:[%s1 + $0x1cc] sm:$0xf]
    %v152 = vld [vmem:[%s1 + $0x1d0] sm:$0xf]
    %v153 = vld [vmem:[%s1 + $0x1d4] sm:$0xf]
    %v154 = vld [vmem:[%s1 + $0x1d8] sm:$0xf]
    %v155 = vld [vmem:[%s1 + $0x1dc] sm:$0xf]
    %v156 = vld [vmem:[%s1 + $0x1e0] sm:$0xf]
    %v157 = vld [vmem:[%s1 + $0x1e4] sm:$0xf]
    %v158 = vld [vmem:[%s1 + $0x1e8] sm:$0xf]
    %v159 = vld [vmem:[%s1 + $0x1ec] sm:$0xf]
    %v160 = vld [vmem:[%s1 + $0x1f0] sm:$0xf]
    %v161 = vld [vmem:[%s1 + $0x1f4] sm:$0xf]
    %v162 = vld [vmem:[%s1 + $0x1f8] sm:$0xf]
    %v163 = vld [vmem:[%s1 + $0x1fc] sm:$0xf]
    %v164 = vld [vmem:[%s1 + $0x200] sm:$0xf]
    %v165 = vld [vmem:[%s1 + $0x204] sm:$0xf]
    %v166 = vld [vmem:[%s1 + $0x208] sm:$0xf]
    %v167 = vld [vmem:[%s1 + $0x20c] sm:$0xf]
    %v168 = vld [vmem:[%s1 + $0x210] sm:$0xf]
    %v169 = vld [vmem:[%s1 + $0x214] sm:$0xf]
    %v170 = vld [vmem:[%s1 + $0x218] sm:$0xf]
    %v171 = vld [vmem:[%s1 + $0x21c] sm:$0xf]
    %v172 = vld [vmem:[%s1 + $0x220] sm:$0xf]
    %v173 = vld [vmem:[%s1 + $0x224] sm:$0xf]
    %v174 = vld [vmem:[%s1 + $0x228] sm:$0xf]
    %v175 = vld [vmem:[%s1 + $0x22c] sm:$0xf]
    %v176 = vld [vmem:[%s1 + $0x230] sm:$0xf]
    %v177 = vld [vmem:[%s1 + $0x234] sm:$0xf]
    %v178 = vld [vmem:[%s1 + $0x238] sm:$0xf]
    %v179 = vld [vmem:[%s1 + $0x23c] sm:$0xf]
    %v180 = vld [vmem:[%s2] sm:$0x1]
    %v182 = vlaneseq
    %v183 = vshrl.u32 %v182, 7
    %v184 = vsub.s32 0, %v183
    %v185 = vrot.slane %v180, %v184
    %v195 = vcombine.low %v28, %v30
    %v196 = vcombine.high %v28, %v30
    %v197 = vcombine.low %v32, %v34
    %v198 = vcombine.high %v32, %v34
    %v200 = vunpack.c.l.s4 1966171168
    %v201 = vunpack.c.0.s8 %v200
    %v202 = vlaneseq
    %v203 = vshrl.u32 %v202, 7
    %v204 = vsub.s32 %v201, %v203
    %v205 = vrot.slane %v195, %v204
    %v207 = vunpack.c.l.s4 1966171168
    %v208 = vunpack.c.0.s8 %v207
    %v209 = vlaneseq
    %v210 = vshrl.u32 %v209, 7
    %v211 = vsub.s32 %v208, %v210
    %v212 = vrot.slane %v196, %v211
    %v214 = vunpack.c.l.s4 1966171168
    %v215 = vunpack.c.0.s8 %v214
    %v216 = vlaneseq
    %v217 = vshrl.u32 %v216, 7
    %v218 = vsub.s32 %v215, %v217
    %v219 = vrot.slane %v197, %v218
    %v221 = vunpack.c.l.s4 1966171168
    %v222 = vunpack.c.0.s8 %v221
    %v223 = vlaneseq
    %v224 = vshrl.u32 %v223, 7
    %v225 = vsub.s32 %v222, %v224
    %v226 = vrot.slane %v198, %v225
    %v227 = vcombine.low %v205, %v219
    %v228 = vcombine.high %v205, %v219
    %v229 = vcombine.low %v212, %v226
    %v230 = vcombine.high %v212, %v226
    %v232 = vunpack.c.l.s4 1966171168
    %v233 = vunpack.c.0.s8 %v232
    %v234 = vlaneseq
    %v235 = vshrl.u32 %v234, 7
    %v236 = vsub.s32 %v233, %v235
    %v237 = vrot.slane %v227, %v236
    %v239 = vunpack.c.l.s4 1966171168
    %v240 = vunpack.c.0.s8 %v239
    %v241 = vlaneseq
    %v242 = vshrl.u32 %v241, 7
    %v243 = vsub.s32 %v240, %v242
    %v244 = vrot.slane %v229, %v243
    %v246 = vunpack.c.l.s4 1966171168
    %v247 = vunpack.c.0.s8 %v246
    %v248 = vlaneseq
    %v249 = vshrl.u32 %v248, 7
    %v250 = vsub.s32 %v247, %v249
    %v251 = vrot.slane %v228, %v250
    %v253 = vunpack.c.l.s4 1966171168
    %v254 = vunpack.c.0.s8 %v253
    %v255 = vlaneseq
    %v256 = vshrl.u32 %v255, 7
    %v257 = vsub.s32 %v254, %v256
    %v258 = vrot.slane %v230, %v257
    %v259 = vcombine.high %v237, %v237
    %v260 = vcombine.high %v244, %v244
    %v261 = vcombine.high %v251, %v251
    %v262 = vcombine.high %v258, %v258
    %v263 = vcombine.low %v29, %v31
    %v264 = vcombine.low %v33, %v35
    %v266 = vunpack.c.l.s4 1966171168
    %v267 = vunpack.c.0.s8 %v266
    %v268 = vlaneseq
    %v269 = vshrl.u32 %v268, 7
    %v270 = vsub.s32 %v267, %v269
    %v271 = vrot.slane %v263, %v270
    %v273 = vunpack.c.l.s4 1966171168
    %v274 = vunpack.c.0.s8 %v273
    %v275 = vlaneseq
    %v276 = vshrl.u32 %v275, 7
    %v277 = vsub.s32 %v274, %v276
    %v278 = vrot.slane %v264, %v277
    %v279 = vcombine.low %v271, %v278
    %v281 = vunpack.c.l.s4 1966171168
    %v282 = vunpack.c.0.s8 %v281
    %v283 = vlaneseq
    %v284 = vshrl.u32 %v283, 7
    %v285 = vsub.s32 %v282, %v284
    %v286 = vrot.slane %v279, %v285
    %v440 = vunpack.c.l.b16 %v36
    %v441 = vunpack.c.l.b16 %v37
    %v442 = vunpack.c.l.b16 %v38
    %v443 = vunpack.c.l.b16 %v39
    %v444 = vunpack.c.l.b16 %v40
    %v445 = vunpack.c.l.b16 %v41
    %v446 = vunpack.c.l.b16 %v42
    %v447 = vunpack.c.l.b16 %v43
    %v448 = vunpack.c.l.b16 %v44
    %v449 = vunpack.c.l.b16 %v45
    %v450 = vunpack.c.l.b16 %v46
    %v451 = vunpack.c.l.b16 %v47
    %v452 = vunpack.c.l.b16 %v48
    %v453 = vunpack.c.l.b16 %v49
    %v454 = vunpack.c.l.b16 %v50
    %v455 = vunpack.c.l.b16 %v51
    %v456 = vunpack.c.l.b16 %v52
    %v457 = vunpack.c.l.b16 %v53
    %v458 = vunpack.c.l.b16 %v54
    %v459 = vunpack.c.l.b16 %v55
    %v460 = vunpack.c.l.b16 %v56
    %v461 = vunpack.c.l.b16 %v57
    %v462 = vunpack.c.l.b16 %v58
    %v463 = vunpack.c.l.b16 %v59
    %v464 = vunpack.c.l.b16 %v60
    %v465 = vunpack.c.l.b16 %v61
    %v466 = vunpack.c.l.b16 %v62
    %v467 = vunpack.c.l.b16 %v63
    %v468 = vunpack.c.l.b16 %v64
    %v469 = vunpack.c.l.b16 %v65
    %v470 = vunpack.c.l.b16 %v66
    %v471 = vunpack.c.l.b16 %v67
    %v472 = vunpack.c.l.b16 %v68
    %v473 = vunpack.c.l.b16 %v69
    %v474 = vunpack.c.l.b16 %v70
    %v475 = vunpack.c.l.b16 %v71
    %v476 = vunpack.c.l.b16 %v72
    %v477 = vunpack.c.l.b16 %v73
    %v478 = vunpack.c.l.b16 %v74
    %v479 = vunpack.c.l.b16 %v75
    %v480 = vunpack.c.l.b16 %v76
    %v481 = vunpack.c.l.b16 %v77
    %v482 = vunpack.c.l.b16 %v78
    %v483 = vunpack.c.l.b16 %v79
    %v484 = vunpack.c.l.b16 %v80
    %v485 = vunpack.c.l.b16 %v81
    %v486 = vunpack.c.l.b16 %v82
    %v487 = vunpack.c.l.b16 %v83
    %v488 = vunpack.c.l.b16 %v84
    %v489 = vunpack.c.l.b16 %v85
    %v490 = vunpack.c.l.b16 %v86
    %v491 = vunpack.c.l.b16 %v87
    %v492 = vunpack.c.l.b16 %v88
    %v493 = vunpack.c.l.b16 %v89
    %v494 = vunpack.c.l.b16 %v90
    %v495 = vunpack.c.l.b16 %v91
    %v496 = vunpack.c.l.b16 %v92
    %v497 = vunpack.c.l.b16 %v93
    %v498 = vunpack.c.l.b16 %v94
    %v499 = vunpack.c.l.b16 %v95
    %v500 = vunpack.c.l.b16 %v96
    %v501 = vunpack.c.l.b16 %v97
    %v502 = vunpack.c.l.b16 %v98
    %v503 = vunpack.c.l.b16 %v99
    %v504 = vunpack.c.l.b16 %v100
    %v505 = vunpack.c.l.b16 %v101
    %v506 = vunpack.c.l.b16 %v102
    %v507 = vunpack.c.l.b16 %v103
    %v508 = vunpack.c.l.b16 %v104
    %v509 = vunpack.c.l.b16 %v105
    %v510 = vunpack.c.l.b16 %v106
    %v511 = vunpack.c.l.b16 %v107
    %v512 = vunpack.c.l.b16 %v108
    %v513 = vunpack.c.l.b16 %v109
    %v514 = vunpack.c.l.b16 %v110
    %v515 = vunpack.c.l.b16 %v111
    %v516 = vunpack.c.l.b16 %v112
    %v517 = vunpack.c.l.b16 %v113
    %v518 = vunpack.c.l.b16 %v114
    %v519 = vunpack.c.l.b16 %v115
    %v520 = vunpack.c.l.b16 %v116
    %v521 = vunpack.c.l.b16 %v117
    %v522 = vunpack.c.l.b16 %v118
    %v523 = vunpack.c.l.b16 %v119
    %v524 = vunpack.c.l.b16 %v120
    %v525 = vunpack.c.l.b16 %v121
    %v526 = vunpack.c.l.b16 %v122
    %v527 = vunpack.c.l.b16 %v123
    %v528 = vunpack.c.l.b16 %v124
    %v529 = vunpack.c.l.b16 %v125
    %v530 = vunpack.c.l.b16 %v126
    %v531 = vunpack.c.l.b16 %v127
    %v532 = vunpack.c.l.b16 %v128
    %v533 = vunpack.c.l.b16 %v129
    %v534 = vunpack.c.l.b16 %v130
    %v535 = vunpack.c.l.b16 %v131
    %v536 = vunpack.c.l.b16 %v132
    %v537 = vunpack.c.l.b16 %v133
    %v538 = vunpack.c.l.b16 %v134
    %v539 = vunpack.c.l.b16 %v135
    %v540 = vunpack.c.l.b16 %v136
    %v541 = vunpack.c.l.b16 %v137
    %v542 = vunpack.c.l.b16 %v138
    %v543 = vunpack.c.l.b16 %v139
    %v544 = vunpack.c.l.b16 %v140
    %v545 = vunpack.c.l.b16 %v141
    %v546 = vunpack.c.l.b16 %v142
    %v547 = vunpack.c.l.b16 %v143
    %v548 = vunpack.c.l.b16 %v144
    %v549 = vunpack.c.l.b16 %v145
    %v550 = vunpack.c.l.b16 %v146
    %v551 = vunpack.c.l.b16 %v147
    %v552 = vunpack.c.l.b16 %v148
    %v553 = vunpack.c.l.b16 %v149
    %v554 = vunpack.c.l.b16 %v150
    %v555 = vunpack.c.l.b16 %v151
    %v556 = vunpack.c.l.b16 %v152
    %v557 = vunpack.c.l.b16 %v153
    %v558 = vunpack.c.l.b16 %v154
    %v559 = vunpack.c.l.b16 %v155
    %v560 = vunpack.c.l.b16 %v156
    %v561 = vunpack.c.l.b16 %v157
    %v562 = vunpack.c.l.b16 %v158
    %v563 = vunpack.c.l.b16 %v159
    %v564 = vunpack.c.l.b16 %v160
    %v565 = vunpack.c.l.b16 %v161
    %v566 = vunpack.c.l.b16 %v162
    %v567 = vunpack.c.l.b16 %v163
    %v568 = vunpack.c.l.b16 %v164
    %v569 = vunpack.c.l.b16 %v165
    %v570 = vunpack.c.l.b16 %v166
    %v571 = vunpack.c.l.b16 %v167
    %v572 = vunpack.c.l.b16 %v168
    %v573 = vunpack.c.l.b16 %v169
    %v574 = vunpack.c.l.b16 %v170
    %v575 = vunpack.c.l.b16 %v171
    %v576 = vunpack.c.l.b16 %v172
    %v577 = vunpack.c.l.b16 %v173
    %v578 = vunpack.c.l.b16 %v174
    %v579 = vunpack.c.l.b16 %v175
    %v580 = vunpack.c.l.b16 %v176
    %v581 = vunpack.c.l.b16 %v177
    %v582 = vunpack.c.l.b16 %v178
    %v583 = vunpack.c.l.b16 %v179
    %v584 = vpack.c.b16 %v441, %v440
    %v585 = vpack.c.b16 %v443, %v442
    %v586 = vpack.c.b16 %v445, %v444
    %v587 = vpack.c.b16 %v447, %v446
    %v588 = vpack.c.b16 %v449, %v448
    %v589 = vpack.c.b16 %v451, %v450
    %v590 = vpack.c.b16 %v453, %v452
    %v591 = vpack.c.b16 %v455, %v454
    %v592 = vpack.c.b16 %v457, %v456
    %v593 = vpack.c.b16 %v459, %v458
    %v594 = vpack.c.b16 %v461, %v460
    %v595 = vpack.c.b16 %v463, %v462
    %v596 = vpack.c.b16 %v465, %v464
    %v597 = vpack.c.b16 %v467, %v466
    %v598 = vpack.c.b16 %v469, %v468
    %v599 = vpack.c.b16 %v471, %v470
    %v600 = vpack.c.b16 %v473, %v472
    %v601 = vpack.c.b16 %v475, %v474
    %v602 = vpack.c.b16 %v477, %v476
    %v603 = vpack.c.b16 %v479, %v478
    %v604 = vpack.c.b16 %v481, %v480
    %v605 = vpack.c.b16 %v483, %v482
    %v606 = vpack.c.b16 %v485, %v484
    %v607 = vpack.c.b16 %v487, %v486
    %v608 = vpack.c.b16 %v489, %v488
    %v609 = vpack.c.b16 %v491, %v490
    %v610 = vpack.c.b16 %v493, %v492
    %v611 = vpack.c.b16 %v495, %v494
    %v612 = vpack.c.b16 %v497, %v496
    %v613 = vpack.c.b16 %v499, %v498
    %v614 = vpack.c.b16 %v501, %v500
    %v615 = vpack.c.b16 %v503, %v502
    %v616 = vpack.c.b16 %v505, %v504
    %v617 = vpack.c.b16 %v507, %v506
    %v618 = vpack.c.b16 %v509, %v508
    %v619 = vpack.c.b16 %v511, %v510
    %v620 = vpack.c.b16 %v513, %v512
    %v621 = vpack.c.b16 %v515, %v514
    %v622 = vpack.c.b16 %v517, %v516
    %v623 = vpack.c.b16 %v519, %v518
    %v624 = vpack.c.b16 %v521, %v520
    %v625 = vpack.c.b16 %v523, %v522
    %v626 = vpack.c.b16 %v525, %v524
    %v627 = vpack.c.b16 %v527, %v526
    %v628 = vpack.c.b16 %v529, %v528
    %v629 = vpack.c.b16 %v531, %v530
    %v630 = vpack.c.b16 %v533, %v532
    %v631 = vpack.c.b16 %v535, %v534
    %v632 = vpack.c.b16 %v537, %v536
    %v633 = vpack.c.b16 %v539, %v538
    %v634 = vpack.c.b16 %v541, %v540
    %v635 = vpack.c.b16 %v543, %v542
    %v636 = vpack.c.b16 %v545, %v544
    %v637 = vpack.c.b16 %v547, %v546
    %v638 = vpack.c.b16 %v549, %v548
    %v639 = vpack.c.b16 %v551, %v550
    %v640 = vpack.c.b16 %v553, %v552
    %v641 = vpack.c.b16 %v555, %v554
    %v642 = vpack.c.b16 %v557, %v556
    %v643 = vpack.c.b16 %v559, %v558
    %v644 = vpack.c.b16 %v561, %v560
    %v645 = vpack.c.b16 %v563, %v562
    %v646 = vpack.c.b16 %v565, %v564
    %v647 = vpack.c.b16 %v567, %v566
    %v648 = vpack.c.b16 %v569, %v568
    %v649 = vpack.c.b16 %v571, %v570
    %v650 = vpack.c.b16 %v573, %v572
    %v651 = vpack.c.b16 %v575, %v574
    %v652 = vpack.c.b16 %v577, %v576
    %v653 = vpack.c.b16 %v579, %v578
    %v654 = vpack.c.b16 %v581, %v580
    %v655 = vpack.c.b16 %v583, %v582
    %728 = vmatprep.subr.bf16.mxu0 0
    %729 = vmatpush1.bf16.msra.mxu0 %v591
    %730 = vmatprep.subr.bf16.mxu0 0
    %731 = vmatpush1.bf16.msra.mxu0 %v590
    %732 = vmatprep.subr.bf16.mxu0 0
    %733 = vmatpush1.bf16.msra.mxu0 %v589
    %734 = vmatprep.subr.bf16.mxu0 0
    %735 = vmatpush1.bf16.msra.mxu0 %v588
    %736 = vmatprep.subr.bf16.mxu0 0
    %737 = vmatpush1.bf16.msra.mxu0 %v587
    %738 = vmatprep.subr.bf16.mxu0 0
    %739 = vmatpush1.bf16.msra.mxu0 %v586
    %740 = vmatprep.subr.bf16.mxu0 0
    %741 = vmatpush1.bf16.msra.mxu0 %v585
    %742 = vmatprep.subr.bf16.mxu0 0
    %743 = vmatpush1.bf16.msra.mxu0 %v584
    %744 = vmatprep.subr.bf16.mxu0 0
    %745 = vmatpush2.bf16.msra.mxu0 %v599
    %746 = vmatprep.subr.bf16.mxu0 0
    %747 = vmatpush2.bf16.msra.mxu0 %v598
    %748 = vmatprep.subr.bf16.mxu0 0
    %749 = vmatpush2.bf16.msra.mxu0 %v597
    %750 = vmatprep.subr.bf16.mxu0 0
    %751 = vmatpush2.bf16.msra.mxu0 %v596
    %752 = vmatprep.subr.bf16.mxu0 0
    %753 = vmatpush2.bf16.msra.mxu0 %v595
    %754 = vmatprep.subr.bf16.mxu0 0
    %755 = vmatpush2.bf16.msra.mxu0 %v594
    %756 = vmatprep.subr.bf16.mxu0 0
    %757 = vmatpush2.bf16.msra.mxu0 %v593
    %758 = vmatprep.subr.bf16.mxu0 0
    %759 = vmatpush2.bf16.msra.mxu0 %v592
    %760 = vmatprep.mubr.bf16.mxu0 %v251
    %761 = vmatmul.mubr.bf16.gmra.mxu0 %v237
    %v762 = vpop.f32.mrf.mxu0
    %v763 = vadd.f32 %v185, %v762
    %v764 = vpop.f32.mrf.mxu0
    %v765 = vpop.f32.mrf.mxu0
    %v766 = vpop.f32.mrf.mxu0
    %767 = vdwg.mxu0
    %768 = vmatprep.subr.bf16.mxu0 0
    %769 = vmatpush1.bf16.msra.mxu0 %v607
    %770 = vmatprep.subr.bf16.mxu0 0
    %771 = vmatpush1.bf16.msra.mxu0 %v606
    %772 = vmatprep.subr.bf16.mxu0 0
    %773 = vmatpush1.bf16.msra.mxu0 %v605
    %774 = vmatprep.subr.bf16.mxu0 0
    %775 = vmatpush1.bf16.msra.mxu0 %v604
    %776 = vmatprep.subr.bf16.mxu0 0
    %777 = vmatpush1.bf16.msra.mxu0 %v603
    %778 = vmatprep.subr.bf16.mxu0 0
    %779 = vmatpush1.bf16.msra.mxu0 %v602
    %780 = vmatprep.subr.bf16.mxu0 0
    %781 = vmatpush1.bf16.msra.mxu0 %v601
    %782 = vmatprep.subr.bf16.mxu0 0
    %783 = vmatpush1.bf16.msra.mxu0 %v600
    %784 = vmatprep.subr.bf16.mxu0 0
    %785 = vmatpush2.bf16.msra.mxu0 %v615
    %786 = vmatprep.subr.bf16.mxu0 0
    %787 = vmatpush2.bf16.msra.mxu0 %v614
    %788 = vmatprep.subr.bf16.mxu0 0
    %789 = vmatpush2.bf16.msra.mxu0 %v613
    %790 = vmatprep.subr.bf16.mxu0 0
    %791 = vmatpush2.bf16.msra.mxu0 %v612
    %792 = vmatprep.subr.bf16.mxu0 0
    %793 = vmatpush2.bf16.msra.mxu0 %v611
    %794 = vmatprep.subr.bf16.mxu0 0
    %795 = vmatpush2.bf16.msra.mxu0 %v610
    %796 = vmatprep.subr.bf16.mxu0 0
    %797 = vmatpush2.bf16.msra.mxu0 %v609
    %798 = vmatprep.subr.bf16.mxu0 0
    %799 = vmatpush2.bf16.msra.mxu0 %v608
    %800 = vmatprep.mubr.bf16.mxu0 %v261
    %801 = vmatmul.mubr.bf16.gmra.mxu0 %v259
    %v802 = vpop.f32.mrf.mxu0
    %v803 = vadd.f32 %v763, %v802
    %v804 = vpop.f32.mrf.mxu0
    %v805 = vpop.f32.mrf.mxu0
    %v806 = vpop.f32.mrf.mxu0
    %807 = vdwg.mxu0
    %808 = vmatprep.subr.bf16.mxu0 0
    %809 = vmatpush1.bf16.msra.mxu0 %v623
    %810 = vmatprep.subr.bf16.mxu0 0
    %811 = vmatpush1.bf16.msra.mxu0 %v622
    %812 = vmatprep.subr.bf16.mxu0 0
    %813 = vmatpush1.bf16.msra.mxu0 %v621
    %814 = vmatprep.subr.bf16.mxu0 0
    %815 = vmatpush1.bf16.msra.mxu0 %v620
    %816 = vmatprep.subr.bf16.mxu0 0
    %817 = vmatpush1.bf16.msra.mxu0 %v619
    %818 = vmatprep.subr.bf16.mxu0 0
    %819 = vmatpush1.bf16.msra.mxu0 %v618
    %820 = vmatprep.subr.bf16.mxu0 0
    %821 = vmatpush1.bf16.msra.mxu0 %v617
    %822 = vmatprep.subr.bf16.mxu0 0
    %823 = vmatpush1.bf16.msra.mxu0 %v616
    %824 = vmatprep.subr.bf16.mxu0 0
    %825 = vmatpush2.bf16.msra.mxu0 %v631
    %826 = vmatprep.subr.bf16.mxu0 0
    %827 = vmatpush2.bf16.msra.mxu0 %v630
    %828 = vmatprep.subr.bf16.mxu0 0
    %829 = vmatpush2.bf16.msra.mxu0 %v629
    %830 = vmatprep.subr.bf16.mxu0 0
    %831 = vmatpush2.bf16.msra.mxu0 %v628
    %832 = vmatprep.subr.bf16.mxu0 0
    %833 = vmatpush2.bf16.msra.mxu0 %v627
    %834 = vmatprep.subr.bf16.mxu0 0
    %835 = vmatpush2.bf16.msra.mxu0 %v626
    %836 = vmatprep.subr.bf16.mxu0 0
    %837 = vmatpush2.bf16.msra.mxu0 %v625
    %838 = vmatprep.subr.bf16.mxu0 0
    %839 = vmatpush2.bf16.msra.mxu0 %v624
    %840 = vmatprep.mubr.bf16.mxu0 %v258
    %841 = vmatmul.mubr.bf16.gmra.mxu0 %v244
    %v842 = vpop.f32.mrf.mxu0
    %v843 = vadd.f32 %v803, %v842
    %v844 = vpop.f32.mrf.mxu0
    %v845 = vpop.f32.mrf.mxu0
    %v846 = vpop.f32.mrf.mxu0
    %847 = vdwg.mxu0
    %848 = vmatprep.subr.bf16.mxu0 0
    %849 = vmatpush1.bf16.msra.mxu0 %v639
    %850 = vmatprep.subr.bf16.mxu0 0
    %851 = vmatpush1.bf16.msra.mxu0 %v638
    %852 = vmatprep.subr.bf16.mxu0 0
    %853 = vmatpush1.bf16.msra.mxu0 %v637
    %854 = vmatprep.subr.bf16.mxu0 0
    %855 = vmatpush1.bf16.msra.mxu0 %v636
    %856 = vmatprep.subr.bf16.mxu0 0
    %857 = vmatpush1.bf16.msra.mxu0 %v635
    %858 = vmatprep.subr.bf16.mxu0 0
    %859 = vmatpush1.bf16.msra.mxu0 %v634
    %860 = vmatprep.subr.bf16.mxu0 0
    %861 = vmatpush1.bf16.msra.mxu0 %v633
    %862 = vmatprep.subr.bf16.mxu0 0
    %863 = vmatpush1.bf16.msra.mxu0 %v632
    %864 = vmatprep.subr.bf16.mxu0 0
    %865 = vmatpush2.bf16.msra.mxu0 %v647
    %866 = vmatprep.subr.bf16.mxu0 0
    %867 = vmatpush2.bf16.msra.mxu0 %v646
    %868 = vmatprep.subr.bf16.mxu0 0
    %869 = vmatpush2.bf16.msra.mxu0 %v645
    %870 = vmatprep.subr.bf16.mxu0 0
    %871 = vmatpush2.bf16.msra.mxu0 %v644
    %872 = vmatprep.subr.bf16.mxu0 0
    %873 = vmatpush2.bf16.msra.mxu0 %v643
    %874 = vmatprep.subr.bf16.mxu0 0
    %875 = vmatpush2.bf16.msra.mxu0 %v642
    %876 = vmatprep.subr.bf16.mxu0 0
    %877 = vmatpush2.bf16.msra.mxu0 %v641
    %878 = vmatprep.subr.bf16.mxu0 0
    %879 = vmatpush2.bf16.msra.mxu0 %v640
    %880 = vmatprep.mubr.bf16.mxu0 %v262
    %881 = vmatmul.mubr.bf16.gmra.mxu0 %v260
    %v882 = vpop.f32.mrf.mxu0
    %v883 = vadd.f32 %v843, %v882
    %v884 = vpop.f32.mrf.mxu0
    %v885 = vpop.f32.mrf.mxu0
    %v886 = vpop.f32.mrf.mxu0
    %887 = vdwg.mxu0
    %888 = vmatprep.subr.bf16.mxu0 0
    %889 = vmatpush1.bf16.msra.mxu0 %v655
    %890 = vmatprep.subr.bf16.mxu0 0
    %891 = vmatpush1.bf16.msra.mxu0 %v654
    %892 = vmatprep.subr.bf16.mxu0 0
    %893 = vmatpush1.bf16.msra.mxu0 %v653
    %894 = vmatprep.subr.bf16.mxu0 0
    %895 = vmatpush1.bf16.msra.mxu0 %v652
    %896 = vmatprep.subr.bf16.mxu0 0
    %897 = vmatpush1.bf16.msra.mxu0 %v651
    %898 = vmatprep.subr.bf16.mxu0 0
    %899 = vmatpush1.bf16.msra.mxu0 %v650
    %900 = vmatprep.subr.bf16.mxu0 0
    %901 = vmatpush1.bf16.msra.mxu0 %v649
    %902 = vmatprep.subr.bf16.mxu0 0
    %903 = vmatpush1.bf16.msra.mxu0 %v648
    %904 = vmatprep.subr.bf16.mxu0 0
    %905 = vmatpush2.bf16.msra.mxu0 0
    %906 = vmatprep.subr.bf16.mxu0 0
    %907 = vmatpush2.bf16.msra.mxu0 0
    %908 = vmatprep.subr.bf16.mxu0 0
    %909 = vmatpush2.bf16.msra.mxu0 0
    %910 = vmatprep.subr.bf16.mxu0 0
    %911 = vmatpush2.bf16.msra.mxu0 0
    %912 = vmatprep.subr.bf16.mxu0 0
    %913 = vmatpush2.bf16.msra.mxu0 0
    %914 = vmatprep.subr.bf16.mxu0 0
    %915 = vmatpush2.bf16.msra.mxu0 0
    %916 = vmatprep.subr.bf16.mxu0 0
    %917 = vmatpush2.bf16.msra.mxu0 0
    %918 = vmatprep.subr.bf16.mxu0 0
    %919 = vmatpush2.bf16.msra.mxu0 0
    %920 = vmatprep.mubr.bf16.mxu0 0
    %921 = vmatmul.mubr.bf16.gmra.mxu0 %v286
    %v922 = vpop.f32.mrf.mxu0
    %v923 = vadd.f32 %v883, %v922
    %v924 = vpop.f32.mrf.mxu0
    %v925 = vpop.f32.mrf.mxu0
    %v926 = vpop.f32.mrf.mxu0
    %927 = vdwg.mxu0
    %v928 = vmax.f32 %v923, 0.0
    %v929 = vld [vmem:[%s3] sm:$0xff]
    %v930 = vld [vmem:[%s3 + $0x8] sm:$0xff]
    %v931 = vld [vmem:[%s3 + $0x10] sm:$0xff]
    %v932 = vld [vmem:[%s3 + $0x18] sm:$0xff]
    %v933 = vld [vmem:[%s3 + $0x20] sm:$0xff]
    %v934 = vld [vmem:[%s3 + $0x28] sm:$0xff]
    %v935 = vld [vmem:[%s3 + $0x30] sm:$0xff]
    %v936 = vld [vmem:[%s3 + $0x38] sm:$0xff]
    %v937 = vld [vmem:[%s3 + $0x40] sm:$0xff]
    %v938 = vld [vmem:[%s3 + $0x48] sm:$0xff]
    %v939 = vld [vmem:[%s3 + $0x50] sm:$0xff]
    %v940 = vld [vmem:[%s3 + $0x58] sm:$0xff]
    %v941 = vld [vmem:[%s3 + $0x60] sm:$0xff]
    %v942 = vld [vmem:[%s3 + $0x68] sm:$0xff]
    %v943 = vld [vmem:[%s3 + $0x70] sm:$0xff]
    %v944 = vld [vmem:[%s3 + $0x78] sm:$0xff]
    %v945 = vld [vmem:[%s4] sm:$0xf]
    %v946 = vpack.c.bf16 %v928, %v928
    %v948 = vlaneseq
    %v949 = vshrl.u32 %v948, 7
    %v950 = vsub.s32 0, %v949
    %v951 = vrot.slane %v945, %v950
    %v952 = vlaneseq
    %v953 = vshrl.u32 %v952, 7
    %v954 = vsub.s32 1, %v953
    %v955 = vrot.slane %v945, %v954
    %v956 = vlaneseq
    %v957 = vshrl.u32 %v956, 7
    %v958 = vsub.s32 2, %v957
    %v959 = vrot.slane %v945, %v958
    %v960 = vlaneseq
    %v961 = vshrl.u32 %v960, 7
    %v962 = vsub.s32 3, %v961
    %v963 = vrot.slane %v945, %v962
    %v984 = vunpack.c.l.b16 %v929
    %v985 = vunpack.c.h.b16 %v929
    %v986 = vunpack.c.l.b16 %v930
    %v987 = vunpack.c.h.b16 %v930
    %v988 = vunpack.c.l.b16 %v931
    %v989 = vunpack.c.h.b16 %v931
    %v990 = vunpack.c.l.b16 %v932
    %v991 = vunpack.c.h.b16 %v932
    %v992 = vunpack.c.l.b16 %v933
    %v993 = vunpack.c.h.b16 %v933
    %v994 = vunpack.c.l.b16 %v934
    %v995 = vunpack.c.h.b16 %v934
    %v996 = vunpack.c.l.b16 %v935
    %v997 = vunpack.c.h.b16 %v935
    %v998 = vunpack.c.l.b16 %v936
    %v999 = vunpack.c.h.b16 %v936
    %v1000 = vunpack.c.l.b16 %v937
    %v1001 = vunpack.c.h.b16 %v937
    %v1002 = vunpack.c.l.b16 %v938
    %v1003 = vunpack.c.h.b16 %v938
    %v1004 = vunpack.c.l.b16 %v939
    %v1005 = vunpack.c.h.b16 %v939
    %v1006 = vunpack.c.l.b16 %v940
    %v1007 = vunpack.c.h.b16 %v940
    %v1008 = vunpack.c.l.b16 %v941
    %v1009 = vunpack.c.h.b16 %v941
    %v1010 = vunpack.c.l.b16 %v942
    %v1011 = vunpack.c.h.b16 %v942
    %v1012 = vunpack.c.l.b16 %v943
    %v1013 = vunpack.c.h.b16 %v943
    %v1014 = vunpack.c.l.b16 %v944
    %v1015 = vunpack.c.h.b16 %v944
    %v1016 = vpack.c.b16 %v988, %v984
    %v1017 = vpack.c.b16 %v989, %v985
    %v1018 = vpack.c.b16 %v990, %v986
    %v1019 = vpack.c.b16 %v991, %v987
    %v1020 = vpack.c.b16 %v996, %v992
    %v1021 = vpack.c.b16 %v997, %v993
    %v1022 = vpack.c.b16 %v998, %v994
    %v1023 = vpack.c.b16 %v999, %v995
    %v1024 = vpack.c.b16 %v1004, %v1000
    %v1025 = vpack.c.b16 %v1005, %v1001
    %v1026 = vpack.c.b16 %v1006, %v1002
    %v1027 = vpack.c.b16 %v1007, %v1003
    %v1028 = vpack.c.b16 %v1012, %v1008
    %v1029 = vpack.c.b16 %v1013, %v1009
    %v1030 = vpack.c.b16 %v1014, %v1010
    %v1031 = vpack.c.b16 %v1015, %v1011
    %vm1048 = vcmask 523264
    %v1050 = vsel %vm1048, %v946, 0
    %1052 = vmatprep.subr.bf16.mxu0 0
    %1053 = vmatpush1.bf16.msra.mxu0 0
    %1054 = vmatprep.subr.bf16.mxu0 0
    %1055 = vmatpush1.bf16.msra.mxu0 0
    %1056 = vmatprep.subr.bf16.mxu0 0
    %1057 = vmatpush1.bf16.msra.mxu0 0
    %1058 = vmatprep.subr.bf16.mxu0 0
    %1059 = vmatpush1.bf16.msra.mxu0 0
    %1060 = vmatprep.subr.bf16.mxu0 %v1029
    %1061 = vmatpush1.bf16.msra.mxu0 %v1028
    %1062 = vmatprep.subr.bf16.mxu0 %v1025
    %1063 = vmatpush1.bf16.msra.mxu0 %v1024
    %1064 = vmatprep.subr.bf16.mxu0 %v1021
    %1065 = vmatpush1.bf16.msra.mxu0 %v1020
    %1066 = vmatprep.subr.bf16.mxu0 %v1017
    %1067 = vmatpush1.bf16.msra.mxu0 %v1016
    %1068 = vmatprep.subr.bf16.mxu0 0
    %1069 = vmatpush2.bf16.msra.mxu0 0
    %1070 = vmatprep.subr.bf16.mxu0 0
    %1071 = vmatpush2.bf16.msra.mxu0 0
    %1072 = vmatprep.subr.bf16.mxu0 0
    %1073 = vmatpush2.bf16.msra.mxu0 0
    %1074 = vmatprep.subr.bf16.mxu0 0
    %1075 = vmatpush2.bf16.msra.mxu0 0
    %1076 = vmatprep.subr.bf16.mxu0 0
    %1077 = vmatpush2.bf16.msra.mxu0 0
    %1078 = vmatprep.subr.bf16.mxu0 0
    %1079 = vmatpush2.bf16.msra.mxu0 0
    %1080 = vmatprep.subr.bf16.mxu0 0
    %1081 = vmatpush2.bf16.msra.mxu0 0
    %1082 = vmatprep.subr.bf16.mxu0 0
    %1083 = vmatpush2.bf16.msra.mxu0 0
    %1084 = vmatprep.mubr.bf16.mxu0 0
    %1085 = vmatmul.mubr.bf16.gmra.mxu0 %v1050
    %v1086 = vpop.f32.mrf.mxu0
    %v1087 = vadd.f32 %v951, %v1086
    %v1088 = vpop.f32.mrf.mxu0
    %v1089 = vadd.f32 %v955, %v1088
    %v1090 = vpop.f32.mrf.mxu0
    %v1091 = vpop.f32.mrf.mxu0
    %1092 = vdwg.mxu0
    %1093 = vmatprep.subr.bf16.mxu0 0
    %1094 = vmatpush1.bf16.msra.mxu0 0
    %1095 = vmatprep.subr.bf16.mxu0 0
    %1096 = vmatpush1.bf16.msra.mxu0 0
    %1097 = vmatprep.subr.bf16.mxu0 0
    %1098 = vmatpush1.bf16.msra.mxu0 0
    %1099 = vmatprep.subr.bf16.mxu0 0
    %1100 = vmatpush1.bf16.msra.mxu0 0
    %1101 = vmatprep.subr.bf16.mxu0 %v1031
    %1102 = vmatpush1.bf16.msra.mxu0 %v1030
    %1103 = vmatprep.subr.bf16.mxu0 %v1027
    %1104 = vmatpush1.bf16.msra.mxu0 %v1026
    %1105 = vmatprep.subr.bf16.mxu0 %v1023
    %1106 = vmatpush1.bf16.msra.mxu0 %v1022
    %1107 = vmatprep.subr.bf16.mxu0 %v1019
    %1108 = vmatpush1.bf16.msra.mxu0 %v1018
    %1109 = vmatprep.subr.bf16.mxu0 0
    %1110 = vmatpush2.bf16.msra.mxu0 0
    %1111 = vmatprep.subr.bf16.mxu0 0
    %1112 = vmatpush2.bf16.msra.mxu0 0
    %1113 = vmatprep.subr.bf16.mxu0 0
    %1114 = vmatpush2.bf16.msra.mxu0 0
    %1115 = vmatprep.subr.bf16.mxu0 0
    %1116 = vmatpush2.bf16.msra.mxu0 0
    %1117 = vmatprep.subr.bf16.mxu0 0
    %1118 = vmatpush2.bf16.msra.mxu0 0
    %1119 = vmatprep.subr.bf16.mxu0 0
    %1120 = vmatpush2.bf16.msra.mxu0 0
    %1121 = vmatprep.subr.bf16.mxu0 0
    %1122 = vmatpush2.bf16.msra.mxu0 0
    %1123 = vmatprep.subr.bf16.mxu0 0
    %1124 = vmatpush2.bf16.msra.mxu0 0
    %1125 = vmatprep.mubr.bf16.mxu0 0
    %1126 = vmatmul.mubr.bf16.gmra.mxu0 %v1050
    %v1127 = vpop.f32.mrf.mxu0
    %v1128 = vadd.f32 %v959, %v1127
    %v1129 = vpop.f32.mrf.mxu0
    %v1130 = vadd.f32 %v963, %v1129
    %v1131 = vpop.f32.mrf.mxu0
    %v1132 = vpop.f32.mrf.mxu0
    %1133 = vdwg.mxu0
    %v1134 = vmax.f32 %v1087, 0.0
    %v1135 = vmax.f32 %v1089, 0.0
    %v1136 = vmax.f32 %v1128, 0.0
    %v1137 = vmax.f32 %v1130, 0.0
    %v1138 = vld [vmem:[%s5] sm:$0xf]
    %v1139 = vld [vmem:[%s5 + $0x4] sm:$0xf]
    %v1140 = vld [vmem:[%s5 + $0x8] sm:$0xf]
    %v1141 = vld [vmem:[%s5 + $0xc] sm:$0xf]
    %v1142 = vld [vmem:[%s5 + $0x10] sm:$0xf]
    %v1143 = vld [vmem:[%s5 + $0x14] sm:$0xf]
    %v1144 = vld [vmem:[%s5 + $0x18] sm:$0xf]
    %v1145 = vld [vmem:[%s5 + $0x1c] sm:$0xf]
    %v1146 = vld [vmem:[%s5 + $0x20] sm:$0xf]
    %v1147 = vld [vmem:[%s5 + $0x24] sm:$0xf]
    %v1148 = vld [vmem:[%s5 + $0x28] sm:$0xf]
    %v1149 = vld [vmem:[%s5 + $0x2c] sm:$0xf]
    %v1150 = vld [vmem:[%s5 + $0x30] sm:$0xf]
    %v1151 = vld [vmem:[%s5 + $0x34] sm:$0xf]
    %v1152 = vld [vmem:[%s5 + $0x38] sm:$0xf]
    %v1153 = vld [vmem:[%s5 + $0x3c] sm:$0xf]
    %v1154 = vld [vmem:[%s5 + $0x40] sm:$0xf]
    %v1155 = vld [vmem:[%s5 + $0x44] sm:$0xf]
    %v1156 = vld [vmem:[%s5 + $0x48] sm:$0xf]
    %v1157 = vld [vmem:[%s5 + $0x4c] sm:$0xf]
    %v1158 = vld [vmem:[%s5 + $0x50] sm:$0xf]
    %v1159 = vld [vmem:[%s5 + $0x54] sm:$0xf]
    %v1160 = vld [vmem:[%s5 + $0x58] sm:$0xf]
    %v1161 = vld [vmem:[%s5 + $0x5c] sm:$0xf]
    %v1162 = vld [vmem:[%s5 + $0x60] sm:$0xf]
    %v1163 = vld [vmem:[%s5 + $0x64] sm:$0xf]
    %v1164 = vld [vmem:[%s5 + $0x68] sm:$0xf]
    %v1165 = vld [vmem:[%s5 + $0x6c] sm:$0xf]
    %v1166 = vld [vmem:[%s5 + $0x70] sm:$0xf]
    %v1167 = vld [vmem:[%s5 + $0x74] sm:$0xf]
    %v1168 = vld [vmem:[%s5 + $0x78] sm:$0xf]
    %v1169 = vld [vmem:[%s5 + $0x7c] sm:$0xf]
    %v1170 = vld [vmem:[%s5 + $0x80] sm:$0xf]
    %v1171 = vld [vmem:[%s5 + $0x84] sm:$0xf]
    %v1172 = vld [vmem:[%s5 + $0x88] sm:$0xf]
    %v1173 = vld [vmem:[%s5 + $0x8c] sm:$0xf]
    %v1174 = vld [vmem:[%s5 + $0x90] sm:$0xf]
    %v1175 = vld [vmem:[%s5 + $0x94] sm:$0xf]
    %v1176 = vld [vmem:[%s5 + $0x98] sm:$0xf]
    %v1177 = vld [vmem:[%s5 + $0x9c] sm:$0xf]
    %v1178 = vld [vmem:[%s5 + $0xa0] sm:$0xf]
    %v1179 = vld [vmem:[%s5 + $0xa4] sm:$0xf]
    %v1180 = vld [vmem:[%s5 + $0xa8] sm:$0xf]
    %v1181 = vld [vmem:[%s5 + $0xac] sm:$0xf]
    %v1182 = vld [vmem:[%s5 + $0xb0] sm:$0xf]
    %v1183 = vld [vmem:[%s5 + $0xb4] sm:$0xf]
    %v1184 = vld [vmem:[%s5 + $0xb8] sm:$0xf]
    %v1185 = vld [vmem:[%s5 + $0xbc] sm:$0xf]
    %v1186 = vld [vmem:[%s5 + $0xc0] sm:$0xf]
    %v1187 = vld [vmem:[%s5 + $0xc4] sm:$0xf]
    %v1188 = vld [vmem:[%s5 + $0xc8] sm:$0xf]
    %v1189 = vld [vmem:[%s5 + $0xcc] sm:$0xf]
    %v1190 = vld [vmem:[%s5 + $0xd0] sm:$0xf]
    %v1191 = vld [vmem:[%s5 + $0xd4] sm:$0xf]
    %v1192 = vld [vmem:[%s5 + $0xd8] sm:$0xf]
    %v1193 = vld [vmem:[%s5 + $0xdc] sm:$0xf]
    %v1194 = vld [vmem:[%s5 + $0xe0] sm:$0xf]
    %v1195 = vld [vmem:[%s5 + $0xe4] sm:$0xf]
    %v1196 = vld [vmem:[%s5 + $0xe8] sm:$0xf]
    %v1197 = vld [vmem:[%s5 + $0xec] sm:$0xf]
    %v1198 = vld [vmem:[%s5 + $0xf0] sm:$0xf]
    %v1199 = vld [vmem:[%s5 + $0xf4] sm:$0xf]
    %v1200 = vld [vmem:[%s5 + $0xf8] sm:$0xf]
    %v1201 = vld [vmem:[%s5 + $0xfc] sm:$0xf]
    %v1202 = vld [vmem:[%s6] sm:$0x1]
    %v1203 = vpack.c.bf16 %v1134, %v1134
    %v1204 = vpack.c.bf16 %v1135, %v1135
    %v1205 = vpack.c.bf16 %v1136, %v1136
    %v1206 = vpack.c.bf16 %v1137, %v1137
    %v1208 = vlaneseq
    %v1209 = vshrl.u32 %v1208, 7
    %v1210 = vsub.s32 0, %v1209
    %v1211 = vrot.slane %v1202, %v1210
    %v1277 = vunpack.c.l.b16 %v1138
    %v1278 = vunpack.c.l.b16 %v1139
    %v1279 = vunpack.c.l.b16 %v1140
    %v1280 = vunpack.c.l.b16 %v1141
    %v1281 = vunpack.c.l.b16 %v1142
    %v1282 = vunpack.c.l.b16 %v1143
    %v1283 = vunpack.c.l.b16 %v1144
    %v1284 = vunpack.c.l.b16 %v1145
    %v1285 = vunpack.c.l.b16 %v1146
    %v1286 = vunpack.c.l.b16 %v1147
    %v1287 = vunpack.c.l.b16 %v1148
    %v1288 = vunpack.c.l.b16 %v1149
    %v1289 = vunpack.c.l.b16 %v1150
    %v1290 = vunpack.c.l.b16 %v1151
    %v1291 = vunpack.c.l.b16 %v1152
    %v1292 = vunpack.c.l.b16 %v1153
    %v1293 = vunpack.c.l.b16 %v1154
    %v1294 = vunpack.c.l.b16 %v1155
    %v1295 = vunpack.c.l.b16 %v1156
    %v1296 = vunpack.c.l.b16 %v1157
    %v1297 = vunpack.c.l.b16 %v1158
    %v1298 = vunpack.c.l.b16 %v1159
    %v1299 = vunpack.c.l.b16 %v1160
    %v1300 = vunpack.c.l.b16 %v1161
    %v1301 = vunpack.c.l.b16 %v1162
    %v1302 = vunpack.c.l.b16 %v1163
    %v1303 = vunpack.c.l.b16 %v1164
    %v1304 = vunpack.c.l.b16 %v1165
    %v1305 = vunpack.c.l.b16 %v1166
    %v1306 = vunpack.c.l.b16 %v1167
    %v1307 = vunpack.c.l.b16 %v1168
    %v1308 = vunpack.c.l.b16 %v1169
    %v1309 = vunpack.c.l.b16 %v1170
    %v1310 = vunpack.c.l.b16 %v1171
    %v1311 = vunpack.c.l.b16 %v1172
    %v1312 = vunpack.c.l.b16 %v1173
    %v1313 = vunpack.c.l.b16 %v1174
    %v1314 = vunpack.c.l.b16 %v1175
    %v1315 = vunpack.c.l.b16 %v1176
    %v1316 = vunpack.c.l.b16 %v1177
    %v1317 = vunpack.c.l.b16 %v1178
    %v1318 = vunpack.c.l.b16 %v1179
    %v1319 = vunpack.c.l.b16 %v1180
    %v1320 = vunpack.c.l.b16 %v1181
    %v1321 = vunpack.c.l.b16 %v1182
    %v1322 = vunpack.c.l.b16 %v1183
    %v1323 = vunpack.c.l.b16 %v1184
    %v1324 = vunpack.c.l.b16 %v1185
    %v1325 = vunpack.c.l.b16 %v1186
    %v1326 = vunpack.c.l.b16 %v1187
    %v1327 = vunpack.c.l.b16 %v1188
    %v1328 = vunpack.c.l.b16 %v1189
    %v1329 = vunpack.c.l.b16 %v1190
    %v1330 = vunpack.c.l.b16 %v1191
    %v1331 = vunpack.c.l.b16 %v1192
    %v1332 = vunpack.c.l.b16 %v1193
    %v1333 = vunpack.c.l.b16 %v1194
    %v1334 = vunpack.c.l.b16 %v1195
    %v1335 = vunpack.c.l.b16 %v1196
    %v1336 = vunpack.c.l.b16 %v1197
    %v1337 = vunpack.c.l.b16 %v1198
    %v1338 = vunpack.c.l.b16 %v1199
    %v1339 = vunpack.c.l.b16 %v1200
    %v1340 = vunpack.c.l.b16 %v1201
    %v1341 = vpack.c.b16 %v1278, %v1277
    %v1342 = vpack.c.b16 %v1280, %v1279
    %v1343 = vpack.c.b16 %v1282, %v1281
    %v1344 = vpack.c.b16 %v1284, %v1283
    %v1345 = vpack.c.b16 %v1286, %v1285
    %v1346 = vpack.c.b16 %v1288, %v1287
    %v1347 = vpack.c.b16 %v1290, %v1289
    %v1348 = vpack.c.b16 %v1292, %v1291
    %v1349 = vpack.c.b16 %v1294, %v1293
    %v1350 = vpack.c.b16 %v1296, %v1295
    %v1351 = vpack.c.b16 %v1298, %v1297
    %v1352 = vpack.c.b16 %v1300, %v1299
    %v1353 = vpack.c.b16 %v1302, %v1301
    %v1354 = vpack.c.b16 %v1304, %v1303
    %v1355 = vpack.c.b16 %v1306, %v1305
    %v1356 = vpack.c.b16 %v1308, %v1307
    %v1357 = vpack.c.b16 %v1310, %v1309
    %v1358 = vpack.c.b16 %v1312, %v1311
    %v1359 = vpack.c.b16 %v1314, %v1313
    %v1360 = vpack.c.b16 %v1316, %v1315
    %v1361 = vpack.c.b16 %v1318, %v1317
    %v1362 = vpack.c.b16 %v1320, %v1319
    %v1363 = vpack.c.b16 %v1322, %v1321
    %v1364 = vpack.c.b16 %v1324, %v1323
    %v1365 = vpack.c.b16 %v1326, %v1325
    %v1366 = vpack.c.b16 %v1328, %v1327
    %v1367 = vpack.c.b16 %v1330, %v1329
    %v1368 = vpack.c.b16 %v1332, %v1331
    %v1369 = vpack.c.b16 %v1334, %v1333
    %v1370 = vpack.c.b16 %v1336, %v1335
    %v1371 = vpack.c.b16 %v1338, %v1337
    %v1372 = vpack.c.b16 %v1340, %v1339
    %1405 = vmatprep.subr.bf16.mxu0 0
    %1406 = vmatpush1.bf16.msra.mxu0 %v1348
    %1407 = vmatprep.subr.bf16.mxu0 0
    %1408 = vmatpush1.bf16.msra.mxu0 %v1347
    %1409 = vmatprep.subr.bf16.mxu0 0
    %1410 = vmatpush1.bf16.msra.mxu0 %v1346
    %1411 = vmatprep.subr.bf16.mxu0 0
    %1412 = vmatpush1.bf16.msra.mxu0 %v1345
    %1413 = vmatprep.subr.bf16.mxu0 0
    %1414 = vmatpush1.bf16.msra.mxu0 %v1344
    %1415 = vmatprep.subr.bf16.mxu0 0
    %1416 = vmatpush1.bf16.msra.mxu0 %v1343
    %1417 = vmatprep.subr.bf16.mxu0 0
    %1418 = vmatpush1.bf16.msra.mxu0 %v1342
    %1419 = vmatprep.subr.bf16.mxu0 0
    %1420 = vmatpush1.bf16.msra.mxu0 %v1341
    %1421 = vmatprep.subr.bf16.mxu0 0
    %1422 = vmatpush2.bf16.msra.mxu0 %v1356
    %1423 = vmatprep.subr.bf16.mxu0 0
    %1424 = vmatpush2.bf16.msra.mxu0 %v1355
    %1425 = vmatprep.subr.bf16.mxu0 0
    %1426 = vmatpush2.bf16.msra.mxu0 %v1354
    %1427 = vmatprep.subr.bf16.mxu0 0
    %1428 = vmatpush2.bf16.msra.mxu0 %v1353
    %1429 = vmatprep.subr.bf16.mxu0 0
    %1430 = vmatpush2.bf16.msra.mxu0 %v1352
    %1431 = vmatprep.subr.bf16.mxu0 0
    %1432 = vmatpush2.bf16.msra.mxu0 %v1351
    %1433 = vmatprep.subr.bf16.mxu0 0
    %1434 = vmatpush2.bf16.msra.mxu0 %v1350
    %1435 = vmatprep.subr.bf16.mxu0 0
    %1436 = vmatpush2.bf16.msra.mxu0 %v1349
    %1437 = vmatprep.mubr.bf16.mxu0 %v1204
    %1438 = vmatmul.mubr.bf16.gmra.mxu0 %v1203
    %v1439 = vpop.f32.mrf.mxu0
    %v1440 = vadd.f32 %v1211, %v1439
    %v1441 = vpop.f32.mrf.mxu0
    %v1442 = vpop.f32.mrf.mxu0
    %v1443 = vpop.f32.mrf.mxu0
    %1444 = vdwg.mxu0
    %1445 = vmatprep.subr.bf16.mxu0 0
    %1446 = vmatpush1.bf16.msra.mxu0 %v1364
    %1447 = vmatprep.subr.bf16.mxu0 0
    %1448 = vmatpush1.bf16.msra.mxu0 %v1363
    %1449 = vmatprep.subr.bf16.mxu0 0
    %1450 = vmatpush1.bf16.msra.mxu0 %v1362
    %1451 = vmatprep.subr.bf16.mxu0 0
    %1452 = vmatpush1.bf16.msra.mxu0 %v1361
    %1453 = vmatprep.subr.bf16.mxu0 0
    %1454 = vmatpush1.bf16.msra.mxu0 %v1360
    %1455 = vmatprep.subr.bf16.mxu0 0
    %1456 = vmatpush1.bf16.msra.mxu0 %v1359
    %1457 = vmatprep.subr.bf16.mxu0 0
    %1458 = vmatpush1.bf16.msra.mxu0 %v1358
    %1459 = vmatprep.subr.bf16.mxu0 0
    %1460 = vmatpush1.bf16.msra.mxu0 %v1357
    %1461 = vmatprep.subr.bf16.mxu0 0
    %1462 = vmatpush2.bf16.msra.mxu0 %v1372
    %1463 = vmatprep.subr.bf16.mxu0 0
    %1464 = vmatpush2.bf16.msra.mxu0 %v1371
    %1465 = vmatprep.subr.bf16.mxu0 0
    %1466 = vmatpush2.bf16.msra.mxu0 %v1370
    %1467 = vmatprep.subr.bf16.mxu0 0
    %1468 = vmatpush2.bf16.msra.mxu0 %v1369
    %1469 = vmatprep.subr.bf16.mxu0 0
    %1470 = vmatpush2.bf16.msra.mxu0 %v1368
    %1471 = vmatprep.subr.bf16.mxu0 0
    %1472 = vmatpush2.bf16.msra.mxu0 %v1367
    %1473 = vmatprep.subr.bf16.mxu0 0
    %1474 = vmatpush2.bf16.msra.mxu0 %v1366
    %1475 = vmatprep.subr.bf16.mxu0 0
    %1476 = vmatpush2.bf16.msra.mxu0 %v1365
    %1477 = vmatprep.mubr.bf16.mxu0 %v1206
    %1478 = vmatmul.mubr.bf16.gmra.mxu0 %v1205
    %v1479 = vpop.f32.mrf.mxu0
    %v1480 = vadd.f32 %v1440, %v1479
    %v1481 = vpop.f32.mrf.mxu0
    %v1482 = vpop.f32.mrf.mxu0
    %v1483 = vpop.f32.mrf.mxu0
    %1484 = vdwg.mxu0
    %1485 = vst [vmem:[#allocation2] sm:$0xff] %v1480
    // Predicated region
    $region30: #{network_forward.5} parent=1 // pred_check
      _
    $region31: #{network_forward.5} parent=1 // pred_check_branch
      %1487 = sbr.rel (0) target = $region33
    $region32: #{network_forward.5} parent=1 // pred_region
      %s1489 = ssub.s32 128, 32
      %1490 = vsyncadd [#allocation3], %s1489
      %s1491 = sshll.u32 [#allocation2], 4
      %s1492 = int_to_ptr.vmem [resolvable:$true] %s1491
      %1497 = dma.vmem_to_hbm [thread:$0]  %s1492, 32, %s7, [#allocation3], 32, 32, 2
    $region33: #{network_forward.5} parent=1 // pred_fallthru
      _
    // Predicated region
    $region34: #{network_forward.5} parent=1 // pred_check
      _
    $region35: #{network_forward.5} parent=1 // pred_check_branch
      %1499 = sbr.rel (0) target = $region37
    $region36: #{network_forward.5} parent=1 // pred_region
      %1500 = dma.done [#allocation3], 128
    $region37: #{network_forward.5} parent=1 // pred_fallthru
      _
    %1501 = vsyncpa [#allocation3], 1

</llo_original>
